<compile_context>
chip_gen: v7x
topology: tpu7x:2x2x1
jax: 0.10.0
libtpu: 0.0.40
codegen_flags: <defaults>
</compile_context>

<pallas_src>
import functools

import jax
import jax.numpy as jnp
from jax.experimental import pallas as pl
from jax.experimental.pallas import tpu as pltpu

LANE = 128        # lane width: feature / node / target dims padded to this
SUBLANE = 8       # sublane width: graph dim padded to this
_VMEM_LIMIT = 64 * 1024 * 1024   # explicit scoped-VMEM cap (v5e default is only 16 MiB)


def _round_up(n, m):
    return ((n + m - 1) // m) * m


def _pad2d(a, rows, cols, dtype=None):
    dtype = a.dtype if dtype is None else dtype
    out = jnp.zeros((rows, cols), dtype)
    return out.at[: a.shape[0], : a.shape[1]].set(a.astype(dtype))


def _pick_tile(n_pad, cap):
    """Largest multiple of LANE <= cap that divides n_pad (n_pad % LANE == 0)."""
    t = min(cap, n_pad)
    while n_pad % t:
        t -= LANE
    return t


# ------------------------------ Pallas kernels --------------------------------

def make_first_kernel(tm, n_nodes):
    """Layer 0: first_h MLP (BN folded into Linear) + partial pooling, tiled over rows."""

    def kernel(x_ref, pool_ref, w1_ref, b1_ref, w2_ref, b2_ref,
               x_out_ref, g_ref):
        i = pl.program_id(0)
        h = jnp.dot(x_ref[...], w1_ref[...],
                    preferred_element_type=jnp.float32) + b1_ref[...]
        h = jnp.maximum(h, 0.0)
        h = jnp.dot(h, w2_ref[...],
                    preferred_element_type=jnp.float32) + b2_ref[...]
        h = jnp.maximum(h, 0.0)
        # Padded node rows would otherwise carry relu(bias) garbage; zero them so
        # padding can never leak into aggregation / readout of real nodes.
        rows = i * tm + jax.lax.broadcasted_iota(jnp.int32, (tm, 1), 0)
        h = jnp.where(rows < n_nodes, h, 0.0)
        g_ref[...] = jnp.dot(pool_ref[...], h, preferred_element_type=jnp.float32)
        x_out_ref[...] = h.astype(x_out_ref.dtype)

    return kernel


def make_conv_kernel(tm, tk, n_nodes):
    """GINConv layer: tiled adj@x aggregation ((1+eps) folded into diag), MLP, partial pool.

    Grid = (row blocks i [parallel], reduction blocks k [arbitrary, last]).
    adj streams (tm, tk) bf16 tiles; x is VMEM-resident (constant index_map);
    the aggregate is built in an f32 VMEM scratch and finalized at k == last.
    """

    def kernel(adj_ref, x_ref, pool_ref, w1_ref, b1_ref, w2_ref, b2_ref,
               x_out_ref, g_ref, acc_ref):
        i = pl.program_id(0)
        k = pl.program_id(1)

        @pl.when(k == 0)
        def _():
            acc_ref[...] = jnp.zeros_like(acc_ref)

        start = pl.multiple_of(k * tk, tk)
        x_blk = x_ref[pl.ds(start, tk), :]                       # bf16 (tk, H)
        acc_ref[...] += jnp.dot(adj_ref[...], x_blk,             # bf16 MXU, f32 acc
                                preferred_element_type=jnp.float32)

        @pl.when(k == pl.num_programs(1) - 1)
        def _():
            h = jnp.dot(acc_ref[...], w1_ref[...],
                        preferred_element_type=jnp.float32) + b1_ref[...]
            h = jnp.maximum(h, 0.0)
            h = jnp.dot(h, w2_ref[...],
                        preferred_element_type=jnp.float32) + b2_ref[...]
            h = jnp.maximum(h, 0.0)
            rows = i * tm + jax.lax.broadcasted_iota(jnp.int32, (tm, 1), 0)
            h = jnp.where(rows < n_nodes, h, 0.0)
            g_ref[...] = jnp.dot(pool_ref[...], h,
                                 preferred_element_type=jnp.float32)
            x_out_ref[...] = h.astype(x_out_ref.dtype)

    return kernel


# ---------------------------- pallas_call wrappers -----------------------------

def _first_layer(x_p, pool_p, w1, b1, w2, b2, *, tm, n_nodes):
    n_pad, f_pad = x_p.shape
    g_pad = pool_p.shape[0]
    h_pad = w1.shape[1]
    n_i = n_pad // tm
    grid_spec = pltpu.PrefetchScalarGridSpec(
        num_scalar_prefetch=0,
        grid=(n_i,),
        in_specs=[
            pl.BlockSpec((tm, f_pad), lambda i: (i, 0)),
            pl.BlockSpec((g_pad, tm), lambda i: (0, i)),
            pl.BlockSpec((f_pad, h_pad), lambda i: (0, 0)),
            pl.BlockSpec((1, h_pad), lambda i: (0, 0)),
            pl.BlockSpec((h_pad, h_pad), lambda i: (0, 0)),
            pl.BlockSpec((1, h_pad), lambda i: (0, 0)),
        ],
        out_specs=[
            pl.BlockSpec((tm, h_pad), lambda i: (i, 0)),
            pl.BlockSpec((g_pad, h_pad), lambda i: (i, 0)),
        ],
    )
    x0, g_all = pl.pallas_call(
        make_first_kernel(tm, n_nodes),
        out_shape=(jax.ShapeDtypeStruct((n_pad, h_pad), jnp.bfloat16),
                   jax.ShapeDtypeStruct((n_i * g_pad, h_pad), jnp.float32)),
        grid_spec=grid_spec,
        compiler_params=pltpu.CompilerParams(
            dimension_semantics=("parallel",),
            vmem_limit_bytes=_VMEM_LIMIT),
    )(x_p, pool_p, w1, b1, w2, b2)
    return x0, g_all.reshape(n_i, g_pad, h_pad).sum(axis=0)


def _conv_layer(adj_p, x_prev, pool_p, w1, b1, w2, b2, *, tm, tk, n_nodes):
    n_pad = adj_p.shape[0]
    g_pad = pool_p.shape[0]
    h_in = x_prev.shape[1]
    h_pad = w1.shape[1]
    n_i = n_pad // tm
    n_k = n_pad // tk
    grid_spec = pltpu.PrefetchScalarGridSpec(
        num_scalar_prefetch=0,
        grid=(n_i, n_k),                                        # reduction axis LAST
        in_specs=[
            pl.BlockSpec((tm, tk), lambda i, k: (i, k)),        # adj tile stream (bf16)
            pl.BlockSpec((n_pad, h_in), lambda i, k: (0, 0)),   # x resident in VMEM
            pl.BlockSpec((g_pad, tm), lambda i, k: (0, i)),     # pool cols for rows i
            pl.BlockSpec((h_in, h_pad), lambda i, k: (0, 0)),
            pl.BlockSpec((1, h_pad), lambda i, k: (0, 0)),
            pl.BlockSpec((h_pad, h_pad), lambda i, k: (0, 0)),
            pl.BlockSpec((1, h_pad), lambda i, k: (0, 0)),
        ],
        out_specs=[
            pl.BlockSpec((tm, h_pad), lambda i, k: (i, 0)),
            pl.BlockSpec((g_pad, h_pad), lambda i, k: (i, 0)),
        ],
        scratch_shapes=[pltpu.VMEM((tm, h_pad), jnp.float32)],
    )
    x_out, g_all = pl.pallas_call(
        make_conv_kernel(tm, tk, n_nodes),
        out_shape=(jax.ShapeDtypeStruct((n_pad, h_pad), jnp.bfloat16),
                   jax.ShapeDtypeStruct((n_i * g_pad, h_pad), jnp.float32)),
        grid_spec=grid_spec,
        compiler_params=pltpu.CompilerParams(
            dimension_semantics=("parallel", "arbitrary"),      # rows split across TCs
            vmem_limit_bytes=_VMEM_LIMIT),
    )(adj_p, x_prev, pool_p, w1, b1, w2, b2)
    return x_out, g_all.reshape(n_i, g_pad, h_pad).sum(axis=0)


# --------------------------------- forward -------------------------------------

@functools.partial(jax.jit,
                   static_argnames=("n_layers", "n_nodes", "n_graphs",
                                    "dim_target", "tm", "tk"))
def gin_forward(flat_params, adj_p, pool_p, pool_rowsum, x_p, *,
                n_layers, n_nodes, n_graphs, dim_target, tm, tk):
    # TODO(synk): stochastic dropout masks not implemented (config p = 0.0 -> identity).
    w1, b1, w2, b2, lw, lb = flat_params[0:6]
    x, g = _first_layer(x_p, pool_p, w1, b1, w2, b2, tm=tm, n_nodes=n_nodes)
    # Layer-0 readout reorder: pooling(Linear(x)) == (pool @ x) @ Lw + rowsum(pool) * Lb.
    # The G-sized epilogue is left to XLA so the hot kernels keep a "parallel" row axis.
    out = jnp.dot(g, lw) + pool_rowsum[:, None] * lb
    for layer in range(1, n_layers):
        w1, b1, w2, b2, lw, lb = flat_params[6 * layer: 6 * layer + 6]
        x, g = _conv_layer(adj_p, x, pool_p, w1, b1, w2, b2,
                           tm=tm, tk=tk, n_nodes=n_nodes)
        out = out + jnp.dot(g, lw) + lb
    return out[:n_graphs, :dim_target]                 # strip graph/target padding


# --------------------------- parameter construction ----------------------------

def linear_params(key, fan_in, fan_out):
    kw, kb = jax.random.split(key)
    bound = 1.0 / float(fan_in) ** 0.5
    w = jax.random.uniform(kw, (fan_in, fan_out), jnp.float32, -bound, bound)
    b = jax.random.uniform(kb, (1, fan_out), jnp.float32, -bound, bound)
    return w, b


def bn_params(key, dim, bn_eps=1e-5):
    # eval-mode BatchNorm1d (fresh running stats) expressed as scale/shift
    kg, kb = jax.random.split(key)
    gamma = jax.random.uniform(kg, (1, dim), jnp.float32, 0.5, 1.5)
    beta = jax.random.uniform(kb, (1, dim), jnp.float32, -0.1, 0.1)
    running_mean = jnp.zeros((1, dim), jnp.float32)
    running_var = jnp.ones((1, dim), jnp.float32)
    s = gamma / jnp.sqrt(running_var + bn_eps)
    t = beta - running_mean * s
    return s, t


def init_gin(key, dim_features, dim_target, config):
    assert config['dropout'][0] == 0.0, "stochastic dropout not implemented"
    hidden = config['hidden_units'][0]
    emb_dims = [hidden[0]] + hidden            # same as the PyTorch module
    f_pad = _round_up(dim_features, LANE)
    t_pad = _round_up(dim_target, LANE)
    flat = []
    for layer, out_dim in enumerate(emb_dims):
        in_dim = dim_features if layer == 0 else emb_dims[layer - 1]
        in_pad = f_pad if layer == 0 else _round_up(emb_dims[layer - 1], LANE)
        out_pad = _round_up(out_dim, LANE)
        key, k1, k2, k3, k4, k5 = jax.random.split(key, 6)
        w1, b1 = linear_params(k1, in_dim, out_dim)
        s1, t1 = bn_params(k2, out_dim)
        w2, b2 = linear_params(k3, out_dim, out_dim)
        s2, t2 = bn_params(k4, out_dim)
        lw, lb = linear_params(k5, out_dim, dim_target)
        # fold eval-mode BN into the preceding Linear: BN(xW+b) = x(W*s) + (b*s + t)
        w1f, b1f = w1 * s1, b1 * s1 + t1
        w2f, b2f = w2 * s2, b2 * s2 + t2
        # TODO(synk): [w1 | lw]-style lane concatenation would fill the 256-wide
        # MXU on v6e/v7x better as hidden dims grow; skipped for hidden=32.
        flat += [
            _pad2d(w1f, in_pad, out_pad), _pad2d(b1f, 1, out_pad),
            _pad2d(w2f, out_pad, out_pad), _pad2d(b2f, 1, out_pad),
            _pad2d(lw, out_pad, t_pad), _pad2d(lb, 1, t_pad),
        ]
    return {'n_layers': len(emb_dims), 'flat': tuple(flat),
            'f_pad': f_pad, 't_pad': t_pad}


# ------------------------------- graph helpers ----------------------------------

def build_adj(edge_index, n_nodes, n_pad, eps=0.0):
    """Dense padded adjacency with GIN's (1+eps)*x_i folded into the diagonal (bf16)."""
    src, dst = edge_index
    adj = jnp.zeros((n_pad, n_pad), jnp.float32)
    adj = adj.at[dst, src].add(1.0)                   # message flows src -> dst
    diag = jnp.arange(n_nodes)
    adj = adj.at[diag, diag].add(1.0 + eps)
    return adj.astype(jnp.bfloat16)                   # small integer counts: exact in bf16


def build_pool(batch, n_graphs, n_pad, mode):
    g_pad = _round_up(max(n_graphs, 1), SUBLANE)       # pad graph dim to 8 sublanes
    n_nodes = batch.shape[0]
    p = jnp.zeros((g_pad, n_pad), jnp.float32)
    p = p.at[batch, jnp.arange(n_nodes)].set(1.0)      # [G_pad, N_pad] one-hot
    if mode == 'mean':
        counts = p.sum(axis=1, keepdims=True)
        p = p / jnp.maximum(counts, 1.0)
    return p


# ----------------------------------- main ---------------------------------------

if __name__ == "__main__":
    key = jax.random.PRNGKey(0)
    dim_features, dim_target = 16, 8
    config = {'dropout': [0.0], 'hidden_units': [[32, 32]],
              'train_eps': [False], 'aggregation': ['sum']}

    n_graphs, nodes_per_graph = 4, 8
    n_nodes = n_graphs * nodes_per_graph
    n_pad = _round_up(n_nodes, LANE)
    # Tile caps sized for v7x's 64 MiB VMEM (double-buffered bf16 adj tiles ~0.5 MiB).
    tm = _pick_tile(n_pad, 256)
    tk = _pick_tile(n_pad, 512)

    key, kx, kp = jax.random.split(key, 3)
    x = jax.random.normal(kx, (n_nodes, dim_features), jnp.float32)

    # deterministic ring graph inside each of the 4 graphs (bidirectional edges)
    srcs, dsts = [], []
    for g in range(n_graphs):
        base = g * nodes_per_graph
        for i in range(nodes_per_graph):
            a = base + i
            b = base + (i + 1) % nodes_per_graph
            srcs += [a, b]
            dsts += [b, a]
    edge_index = jnp.array([srcs, dsts], dtype=jnp.int32)
    batch = jnp.repeat(jnp.arange(n_graphs, dtype=jnp.int32), nodes_per_graph)

    params = init_gin(kp, dim_features, dim_target, config)

    eps = 0.0   # GINConv eps initial value (train_eps only makes it learnable)
    adj_p = build_adj(edge_index, n_nodes, n_pad, eps)
    pool_p = build_pool(batch, n_graphs, n_pad, config['aggregation'][0])
    pool_rowsum = pool_p.sum(axis=1)      # per-graph node counts (sum) / ones (mean)
    x_p = _pad2d(x, n_pad, params['f_pad'])

    out = gin_forward(params['flat'], adj_p, pool_p, pool_rowsum, x_p,
                      n_layers=params['n_layers'], n_nodes=n_nodes,
                      n_graphs=n_graphs, dim_target=dim_target, tm=tm, tk=tk)
    jax.block_until_ready(out)
    assert out.shape == (n_graphs, dim_target)
    assert bool(jnp.all(jnp.isfinite(out)))
    print("KERNEL_OK")
</pallas_src>

<mosaic_0001>
module attributes {stable_mosaic.version = 11 : i64} {
  func.func @kernel(%arg0: i32, %arg1: i32, %arg2: memref<128x128xbf16, #tpu.memory_space<vmem>>, %arg3: memref<128x128xbf16, #tpu.memory_space<vmem>>, %arg4: memref<8x128xf32, #tpu.memory_space<vmem>>, %arg5: memref<128x128xf32, #tpu.memory_space<vmem>>, %arg6: memref<1x128xf32, #tpu.memory_space<vmem>>, %arg7: memref<128x128xf32, #tpu.memory_space<vmem>>, %arg8: memref<1x128xf32, #tpu.memory_space<vmem>>, %arg9: memref<128x128xbf16, #tpu.memory_space<vmem>>, %arg10: memref<8x128xf32, #tpu.memory_space<vmem>>, %arg11: memref<128x128xf32, #tpu.memory_space<vmem>>) attributes {dimension_semantics = [#tpu.dimension_semantics<parallel>, #tpu.dimension_semantics<arbitrary>], iteration_bounds = array<i64: 1, 1>, scalar_prefetch = 0 : i64, scratch_operands = 1 : i64, tpu.core_type = #tpu.core_type<tc>, window_params = [{transform_indices = @transform_0, window_bounds = array<i64: 128, 128>}, {pipeline_mode = #tpu.pipeline_mode<synchronous>, transform_indices = @transform_1, window_bounds = array<i64: 128, 128>}, {transform_indices = @transform_2, window_bounds = array<i64: 8, 128>}, {pipeline_mode = #tpu.pipeline_mode<synchronous>, transform_indices = @transform_3, window_bounds = array<i64: 128, 128>}, {pipeline_mode = #tpu.pipeline_mode<synchronous>, transform_indices = @transform_4, window_bounds = array<i64: 1, 128>}, {pipeline_mode = #tpu.pipeline_mode<synchronous>, transform_indices = @transform_5, window_bounds = array<i64: 128, 128>}, {pipeline_mode = #tpu.pipeline_mode<synchronous>, transform_indices = @transform_6, window_bounds = array<i64: 1, 128>}, {transform_indices = @transform_7, window_bounds = array<i64: 128, 128>}, {transform_indices = @transform_8, window_bounds = array<i64: 8, 128>}]} {
    %c0_i32 = arith.constant 0 : i32
    %0 = arith.cmpi eq, %arg1, %c0_i32 : i32
    %1 = arith.extui %0 : i1 to i32
    %c0_i32_0 = arith.constant 0 : i32
    %2 = arith.cmpi ne, %1, %c0_i32_0 : i32
    scf.if %2 {
      %cst_9 = arith.constant 0.000000e+00 : f32
      %15 = vector.broadcast %cst_9 : f32 to vector<128x128xf32>
      %c0_10 = arith.constant 0 : index
      %c0_11 = arith.constant 0 : index
      %16 = vector.load %arg11[%c0_10, %c0_11] : memref<128x128xf32, #tpu.memory_space<vmem>>, vector<128x128xf32>
      tpu.vector_store %arg11[%c0_10, %c0_11], %15 {strides = array<i32>} : memref<128x128xf32, #tpu.memory_space<vmem>>, vector<128x128xf32>,
    } else {
    }
    %c128_i32 = arith.constant 128 : i32
    %3 = arith.muli %arg1, %c128_i32 : i32
    %4 = tpu.assume_multiple %3, 128 : i32
    %5 = arith.index_cast %4 : i32 to index
    %c0 = arith.constant 0 : index
    %6 = vector.load %arg3[%5, %c0] : memref<128x128xbf16, #tpu.memory_space<vmem>>, vector<128x128xbf16>
    %c0_1 = arith.constant 0 : index
    %c0_2 = arith.constant 0 : index
    %7 = vector.load %arg11[%c0_1, %c0_2] : memref<128x128xf32, #tpu.memory_space<vmem>>, vector<128x128xf32>
    %c0_3 = arith.constant 0 : index
    %c0_4 = arith.constant 0 : index
    %8 = vector.load %arg2[%c0_3, %c0_4] : memref<128x128xbf16, #tpu.memory_space<vmem>>, vector<128x128xbf16>
    %cst = arith.constant dense<0.000000e+00> : vector<128x128xf32>
    %9 = tpu.matmul %8, %6, %cst {dimension_numbers = #tpu.dot_dimension_numbers<[1], [0], [0], [1], [0, 0, 1, 1], [], []>} : vector<128x128xbf16>, vector<128x128xbf16>, vector<128x128xf32> -> vector<128x128xf32>
    %10 = arith.addf %7, %9 : vector<128x128xf32>
    %c0_5 = arith.constant 0 : index
    %c0_6 = arith.constant 0 : index
    %11 = vector.load %arg11[%c0_5, %c0_6] : memref<128x128xf32, #tpu.memory_space<vmem>>, vector<128x128xf32>
    tpu.vector_store %arg11[%c0_5, %c0_6], %10 {strides = array<i32>} : memref<128x128xf32, #tpu.memory_space<vmem>>, vector<128x128xf32>,
    %c0_i32_7 = arith.constant 0 : i32
    %12 = arith.cmpi eq, %arg1, %c0_i32_7 : i32
    %13 = arith.extui %12 : i1 to i32
    %c0_i32_8 = arith.constant 0 : i32
    %14 = arith.cmpi ne, %13, %c0_i32_8 : i32
    scf.if %14 {
      %c0_9 = arith.constant 0 : index
      %c0_10 = arith.constant 0 : index
      %15 = vector.load %arg11[%c0_9, %c0_10] : memref<128x128xf32, #tpu.memory_space<vmem>>, vector<128x128xf32>
      %c0_11 = arith.constant 0 : index
      %c0_12 = arith.constant 0 : index
      %16 = vector.load %arg5[%c0_11, %c0_12] : memref<128x128xf32, #tpu.memory_space<vmem>>, vector<128x128xf32>
      %cst_13 = arith.constant dense<0.000000e+00> : vector<128x128xf32>
      %17 = tpu.matmul %15, %16, %cst_13 {dimension_numbers = #tpu.dot_dimension_numbers<[1], [0], [0], [1], [0, 0, 1, 1], [], []>} : vector<128x128xf32>, vector<128x128xf32>, vector<128x128xf32> -> vector<128x128xf32>
      %c0_14 = arith.constant 0 : index
      %c0_15 = arith.constant 0 : index
      %18 = vector.load %arg6[%c0_14, %c0_15] : memref<1x128xf32, #tpu.memory_space<vmem>>, vector<1x128xf32>
      %19 = vector.broadcast %18 : vector<1x128xf32> to vector<128x128xf32>
      %20 = arith.addf %17, %19 : vector<128x128xf32>
      %cst_16 = arith.constant 0.000000e+00 : f32
      %21 = vector.broadcast %cst_16 : f32 to vector<128x128xf32>
      %22 = arith.maximumf %20, %21 : vector<128x128xf32>
      %c0_17 = arith.constant 0 : index
      %c0_18 = arith.constant 0 : index
      %23 = vector.load %arg7[%c0_17, %c0_18] : memref<128x128xf32, #tpu.memory_space<vmem>>, vector<128x128xf32>
      %cst_19 = arith.constant dense<0.000000e+00> : vector<128x128xf32>
      %24 = tpu.matmul %22, %23, %cst_19 {dimension_numbers = #tpu.dot_dimension_numbers<[1], [0], [0], [1], [0, 0, 1, 1], [], []>} : vector<128x128xf32>, vector<128x128xf32>, vector<128x128xf32> -> vector<128x128xf32>
      %c0_20 = arith.constant 0 : index
      %c0_21 = arith.constant 0 : index
      %25 = vector.load %arg8[%c0_20, %c0_21] : memref<1x128xf32, #tpu.memory_space<vmem>>, vector<1x128xf32>
      %26 = vector.broadcast %25 : vector<1x128xf32> to vector<128x128xf32>
      %27 = arith.addf %24, %26 : vector<128x128xf32>
      %cst_22 = arith.constant 0.000000e+00 : f32
      %28 = vector.broadcast %cst_22 : f32 to vector<128x128xf32>
      %29 = arith.maximumf %27, %28 : vector<128x128xf32>
      %c128_i32_23 = arith.constant 128 : i32
      %30 = arith.muli %arg0, %c128_i32_23 : i32
      %31 = tpu.iota {dimensions = array<i32: 0>} : vector<128x1xi32>
      %32 = vector.broadcast %30 : i32 to vector<128x1xi32>
      %33 = arith.addi %32, %31 : vector<128x1xi32>
      %c32_i32 = arith.constant 32 : i32
      %34 = vector.broadcast %c32_i32 : i32 to vector<128x1xi32>
      %35 = arith.cmpi slt, %33, %34 : vector<128x1xi32>
      %cst_24 = arith.constant 0.000000e+00 : f32
      %36 = vector.shape_cast %35 : vector<128x1xi1> to vector<128x1xi1>
      %37 = vector.broadcast %36 : vector<128x1xi1> to vector<128x128xi1>
      %38 = vector.broadcast %cst_24 : f32 to vector<128x128xf32>
      %39 = arith.select %37, %29, %38 : vector<128x128xi1>, vector<128x128xf32>
      %c0_25 = arith.constant 0 : index
      %c0_26 = arith.constant 0 : index
      %40 = vector.load %arg4[%c0_25, %c0_26] : memref<8x128xf32, #tpu.memory_space<vmem>>, vector<8x128xf32>
      %cst_27 = arith.constant dense<0.000000e+00> : vector<8x128xf32>
      %41 = tpu.matmul %40, %39, %cst_27 {dimension_numbers = #tpu.dot_dimension_numbers<[1], [0], [0], [1], [0, 0, 1, 1], [], []>} : vector<8x128xf32>, vector<128x128xf32>, vector<8x128xf32> -> vector<8x128xf32>
      %c0_28 = arith.constant 0 : index
      %c0_29 = arith.constant 0 : index
      %42 = vector.load %arg10[%c0_28, %c0_29] : memref<8x128xf32, #tpu.memory_space<vmem>>, vector<8x128xf32>
      tpu.vector_store %arg10[%c0_28, %c0_29], %41 {strides = array<i32>} : memref<8x128xf32, #tpu.memory_space<vmem>>, vector<8x128xf32>,
      %43 = arith.truncf %39 : vector<128x128xf32> to vector<128x128xbf16>
      %c0_30 = arith.constant 0 : index
      %c0_31 = arith.constant 0 : index
      %44 = vector.load %arg9[%c0_30, %c0_31] : memref<128x128xbf16, #tpu.memory_space<vmem>>, vector<128x128xbf16>
      tpu.vector_store %arg9[%c0_30, %c0_31], %43 {strides = array<i32>} : memref<128x128xbf16, #tpu.memory_space<vmem>>, vector<128x128xbf16>,
    } else {
    }
    return
  }
  func.func @transform_0(%arg0: i32, %arg1: i32) -> (i32, i32) {
    %c0_i32 = arith.constant 0 : i32
    return %arg0, %arg1 : i32, i32
  }
  func.func @transform_1(%arg0: i32, %arg1: i32) -> (i32, i32) {
    %c0_i32 = arith.constant 0 : i32
    %c0_i32_0 = arith.constant 0 : i32
    %c0_i32_1 = arith.constant 0 : i32
    return %c0_i32, %c0_i32_0 : i32, i32
  }
  func.func @transform_2(%arg0: i32, %arg1: i32) -> (i32, i32) {
    %c0_i32 = arith.constant 0 : i32
    %c0_i32_0 = arith.constant 0 : i32
    return %c0_i32, %arg0 : i32, i32
  }
  func.func @transform_3(%arg0: i32, %arg1: i32) -> (i32, i32) {
    %c0_i32 = arith.constant 0 : i32
    %c0_i32_0 = arith.constant 0 : i32
    %c0_i32_1 = arith.constant 0 : i32
    return %c0_i32, %c0_i32_0 : i32, i32
  }
  func.func @transform_4(%arg0: i32, %arg1: i32) -> (i32, i32) {
    %c0_i32 = arith.constant 0 : i32
    %c0_i32_0 = arith.constant 0 : i32
    %c0_i32_1 = arith.constant 0 : i32
    return %c0_i32, %c0_i32_0 : i32, i32
  }
  func.func @transform_5(%arg0: i32, %arg1: i32) -> (i32, i32) {
    %c0_i32 = arith.constant 0 : i32
    %c0_i32_0 = arith.constant 0 : i32
    %c0_i32_1 = arith.constant 0 : i32
    return %c0_i32, %c0_i32_0 : i32, i32
  }
  func.func @transform_6(%arg0: i32, %arg1: i32) -> (i32, i32) {
    %c0_i32 = arith.constant 0 : i32
    %c0_i32_0 = arith.constant 0 : i32
    %c0_i32_1 = arith.constant 0 : i32
    return %c0_i32, %c0_i32_0 : i32, i32
  }
  func.func @transform_7(%arg0: i32, %arg1: i32) -> (i32, i32) {
    %c0_i32 = arith.constant 0 : i32
    %c0_i32_0 = arith.constant 0 : i32
    return %arg0, %c0_i32 : i32, i32
  }
  func.func @transform_8(%arg0: i32, %arg1: i32) -> (i32, i32) {
    %c0_i32 = arith.constant 0 : i32
    %c0_i32_0 = arith.constant 0 : i32
    return %arg0, %c0_i32 : i32, i32
  }
}

module attributes {stable_mosaic.version = 11 : i64} {
  func.func @kernel(%arg0: i32, %arg1: memref<128x128xf32, #tpu.memory_space<vmem>>, %arg2: memref<8x128xf32, #tpu.memory_space<vmem>>, %arg3: memref<128x128xf32, #tpu.memory_space<vmem>>, %arg4: memref<1x128xf32, #tpu.memory_space<vmem>>, %arg5: memref<128x128xf32, #tpu.memory_space<vmem>>, %arg6: memref<1x128xf32, #tpu.memory_space<vmem>>, %arg7: memref<128x128xbf16, #tpu.memory_space<vmem>>, %arg8: memref<8x128xf32, #tpu.memory_space<vmem>>) attributes {dimension_semantics = [#tpu.dimension_semantics<parallel>], iteration_bounds = array<i64: 1>, scalar_prefetch = 0 : i64, scratch_operands = 0 : i64, tpu.core_type = #tpu.core_type<tc>, window_params = [{transform_indices = @transform_0, window_bounds = array<i64: 128, 128>}, {transform_indices = @transform_1, window_bounds = array<i64: 8, 128>}, {pipeline_mode = #tpu.pipeline_mode<synchronous>, transform_indices = @transform_2, window_bounds = array<i64: 128, 128>}, {pipeline_mode = #tpu.pipeline_mode<synchronous>, transform_indices = @transform_3, window_bounds = array<i64: 1, 128>}, {pipeline_mode = #tpu.pipeline_mode<synchronous>, transform_indices = @transform_4, window_bounds = array<i64: 128, 128>}, {pipeline_mode = #tpu.pipeline_mode<synchronous>, transform_indices = @transform_5, window_bounds = array<i64: 1, 128>}, {transform_indices = @transform_6, window_bounds = array<i64: 128, 128>}, {transform_indices = @transform_7, window_bounds = array<i64: 8, 128>}]} {
    %c0 = arith.constant 0 : index
    %c0_0 = arith.constant 0 : index
    %0 = vector.load %arg1[%c0, %c0_0] : memref<128x128xf32, #tpu.memory_space<vmem>>, vector<128x128xf32>
    %c0_1 = arith.constant 0 : index
    %c0_2 = arith.constant 0 : index
    %1 = vector.load %arg3[%c0_1, %c0_2] : memref<128x128xf32, #tpu.memory_space<vmem>>, vector<128x128xf32>
    %cst = arith.constant dense<0.000000e+00> : vector<128x128xf32>
    %2 = tpu.matmul %0, %1, %cst {dimension_numbers = #tpu.dot_dimension_numbers<[1], [0], [0], [1], [0, 0, 1, 1], [], []>} : vector<128x128xf32>, vector<128x128xf32>, vector<128x128xf32> -> vector<128x128xf32>
    %c0_3 = arith.constant 0 : index
    %c0_4 = arith.constant 0 : index
    %3 = vector.load %arg4[%c0_3, %c0_4] : memref<1x128xf32, #tpu.memory_space<vmem>>, vector<1x128xf32>
    %4 = vector.broadcast %3 : vector<1x128xf32> to vector<128x128xf32>
    %5 = arith.addf %2, %4 : vector<128x128xf32>
    %cst_5 = arith.constant 0.000000e+00 : f32
    %6 = vector.broadcast %cst_5 : f32 to vector<128x128xf32>
    %7 = arith.maximumf %5, %6 : vector<128x128xf32>
    %c0_6 = arith.constant 0 : index
    %c0_7 = arith.constant 0 : index
    %8 = vector.load %arg5[%c0_6, %c0_7] : memref<128x128xf32, #tpu.memory_space<vmem>>, vector<128x128xf32>
    %cst_8 = arith.constant dense<0.000000e+00> : vector<128x128xf32>
    %9 = tpu.matmul %7, %8, %cst_8 {dimension_numbers = #tpu.dot_dimension_numbers<[1], [0], [0], [1], [0, 0, 1, 1], [], []>} : vector<128x128xf32>, vector<128x128xf32>, vector<128x128xf32> -> vector<128x128xf32>
    %c0_9 = arith.constant 0 : index
    %c0_10 = arith.constant 0 : index
    %10 = vector.load %arg6[%c0_9, %c0_10] : memref<1x128xf32, #tpu.memory_space<vmem>>, vector<1x128xf32>
    %11 = vector.broadcast %10 : vector<1x128xf32> to vector<128x128xf32>
    %12 = arith.addf %9, %11 : vector<128x128xf32>
    %cst_11 = arith.constant 0.000000e+00 : f32
    %13 = vector.broadcast %cst_11 : f32 to vector<128x128xf32>
    %14 = arith.maximumf %12, %13 : vector<128x128xf32>
    %c128_i32 = arith.constant 128 : i32
    %15 = arith.muli %arg0, %c128_i32 : i32
    %16 = tpu.iota {dimensions = array<i32: 0>} : vector<128x1xi32>
    %17 = vector.broadcast %15 : i32 to vector<128x1xi32>
    %18 = arith.addi %17, %16 : vector<128x1xi32>
    %c32_i32 = arith.constant 32 : i32
    %19 = vector.broadcast %c32_i32 : i32 to vector<128x1xi32>
    %20 = arith.cmpi slt, %18, %19 : vector<128x1xi32>
    %cst_12 = arith.constant 0.000000e+00 : f32
    %21 = vector.shape_cast %20 : vector<128x1xi1> to vector<128x1xi1>
    %22 = vector.broadcast %21 : vector<128x1xi1> to vector<128x128xi1>
    %23 = vector.broadcast %cst_12 : f32 to vector<128x128xf32>
    %24 = arith.select %22, %14, %23 : vector<128x128xi1>, vector<128x128xf32>
    %c0_13 = arith.constant 0 : index
    %c0_14 = arith.constant 0 : index
    %25 = vector.load %arg2[%c0_13, %c0_14] : memref<8x128xf32, #tpu.memory_space<vmem>>, vector<8x128xf32>
    %cst_15 = arith.constant dense<0.000000e+00> : vector<8x128xf32>
    %26 = tpu.matmul %25, %24, %cst_15 {dimension_numbers = #tpu.dot_dimension_numbers<[1], [0], [0], [1], [0, 0, 1, 1], [], []>} : vector<8x128xf32>, vector<128x128xf32>, vector<8x128xf32> -> vector<8x128xf32>
    %c0_16 = arith.constant 0 : index
    %c0_17 = arith.constant 0 : index
    %27 = vector.load %arg8[%c0_16, %c0_17] : memref<8x128xf32, #tpu.memory_space<vmem>>, vector<8x128xf32>
    tpu.vector_store %arg8[%c0_16, %c0_17], %26 {strides = array<i32>} : memref<8x128xf32, #tpu.memory_space<vmem>>, vector<8x128xf32>,
    %28 = arith.truncf %24 : vector<128x128xf32> to vector<128x128xbf16>
    %c0_18 = arith.constant 0 : index
    %c0_19 = arith.constant 0 : index
    %29 = vector.load %arg7[%c0_18, %c0_19] : memref<128x128xbf16, #tpu.memory_space<vmem>>, vector<128x128xbf16>
    tpu.vector_store %arg7[%c0_18, %c0_19], %28 {strides = array<i32>} : memref<128x128xbf16, #tpu.memory_space<vmem>>, vector<128x128xbf16>,
    return
  }
  func.func @transform_0(%arg0: i32) -> (i32, i32) {
    %c0_i32 = arith.constant 0 : i32
    %c0_i32_0 = arith.constant 0 : i32
    return %arg0, %c0_i32 : i32, i32
  }
  func.func @transform_1(%arg0: i32) -> (i32, i32) {
    %c0_i32 = arith.constant 0 : i32
    %c0_i32_0 = arith.constant 0 : i32
    return %c0_i32, %arg0 : i32, i32
  }
  func.func @transform_2(%arg0: i32) -> (i32, i32) {
    %c0_i32 = arith.constant 0 : i32
    %c0_i32_0 = arith.constant 0 : i32
    %c0_i32_1 = arith.constant 0 : i32
    return %c0_i32, %c0_i32_0 : i32, i32
  }
  func.func @transform_3(%arg0: i32) -> (i32, i32) {
    %c0_i32 = arith.constant 0 : i32
    %c0_i32_0 = arith.constant 0 : i32
    %c0_i32_1 = arith.constant 0 : i32
    return %c0_i32, %c0_i32_0 : i32, i32
  }
  func.func @transform_4(%arg0: i32) -> (i32, i32) {
    %c0_i32 = arith.constant 0 : i32
    %c0_i32_0 = arith.constant 0 : i32
    %c0_i32_1 = arith.constant 0 : i32
    return %c0_i32, %c0_i32_0 : i32, i32
  }
  func.func @transform_5(%arg0: i32) -> (i32, i32) {
    %c0_i32 = arith.constant 0 : i32
    %c0_i32_0 = arith.constant 0 : i32
    %c0_i32_1 = arith.constant 0 : i32
    return %c0_i32, %c0_i32_0 : i32, i32
  }
  func.func @transform_6(%arg0: i32) -> (i32, i32) {
    %c0_i32 = arith.constant 0 : i32
    %c0_i32_0 = arith.constant 0 : i32
    return %arg0, %c0_i32 : i32, i32
  }
  func.func @transform_7(%arg0: i32) -> (i32, i32) {
    %c0_i32 = arith.constant 0 : i32
    %c0_i32_0 = arith.constant 0 : i32
    return %arg0, %c0_i32 : i32, i32
  }
}

</mosaic_0001>

<llo_original>
// kernel: gin_forward.3
$region0: #{gin_forward.3}
  #allocation0 [shape = 'u32[]', space=smem, size = 0x4, offset = 0x4, fixed_abs, tag = 'smem constant byte address 0x4 - core index']
  #allocation1 [shape = 'u32[144,128]{1,0:T(1,128)}', space=vmem, size = 0x12000, scoped, tag = 'internal scratch']
  %s0 = inlined_call_operand.hbm [shape: f32[128,128], index: 0, kind: input, shape index: {}]
  %s1 = inlined_call_operand.hbm [shape: f32[8,128], index: 1, kind: input, shape index: {}]
  %s2 = inlined_call_operand.hbm [shape: f32[128,128], index: 2, kind: input, shape index: {}]
  %s3 = inlined_call_operand.hbm [shape: f32[1,128], index: 3, kind: input, shape index: {}]
  %s4 = inlined_call_operand.hbm [shape: f32[128,128], index: 4, kind: input, shape index: {}]
  %s5 = inlined_call_operand.hbm [shape: f32[1,128], index: 5, kind: input, shape index: {}]
  %s6 = inlined_call_operand.hbm [shape: bf16[128,128], index: 6, kind: output, shape index: {0}]
  %s7 = inlined_call_operand.hbm [shape: f32[8,128], index: 7, kind: output, shape index: {1}]
  %8 = xla_tuple %s6, %s7
  %s9 = sld [smem:[#allocation0]]
  $region66: #{gin_forward.3} parent=0
    _
  %s11 = ssub.s32 1, %s9
  %s12 = scalar_select 0, %s11, %s9
  $region1: #{gin_forward.3} parent=0
    #allocation2 [shape = 'u8[65536]{0}', space=vmem, size = 0x10000, scoped, tag = 'input window, operand 0, single buffered']
    #allocation3 [shape = 's32[1]{0}', space=sflag, size = 0x4, scoped, tag = 'scoped memory for gin_forward.3']
    #allocation4 [shape = 's32[1]{0}', space=sflag, size = 0x4, scoped, tag = 'scoped memory for gin_forward.3']
    #allocation5 [shape = 'u8[4096]{0}', space=vmem, size = 0x1000, scoped, tag = 'input window, operand 1, single buffered']
    #allocation6 [shape = 's32[1]{0}', space=sflag, size = 0x4, scoped, tag = 'scoped memory for gin_forward.3']
    #allocation7 [shape = 'u8[65536]{0}', space=vmem, size = 0x10000, scoped, tag = 'input window, operand 2, single buffered']
    #allocation8 [shape = 'u8[512]{0}', space=vmem, size = 0x400, scoped, tag = 'input window, operand 3, single buffered']
    #allocation9 [shape = 's32[1]{0}', space=sflag, size = 0x4, scoped, tag = 'scoped memory for gin_forward.3']
    #allocation10 [shape = 'u8[65536]{0}', space=vmem, size = 0x10000, scoped, tag = 'input window, operand 4, single buffered']
    #allocation11 [shape = 'u8[512]{0}', space=vmem, size = 0x400, scoped, tag = 'input window, operand 5, single buffered']
    #allocation12 [shape = 's32[1]{0}', space=sflag, size = 0x4, scoped, tag = 'scoped memory for gin_forward.3']
    #allocation13 [shape = 'u8[32768]{0}', space=vmem, size = 0x8000, scoped, tag = 'output window, operand 0, single buffered']
    #allocation14 [shape = 'u8[4096]{0}', space=vmem, size = 0x1000, scoped, tag = 'output window, operand 1, single buffered']
    #allocation15 [shape = 's32[1]{0}', space=sflag, size = 0x4, scoped, tag = 'scoped memory for gin_forward.3']
    %13 = vsyncpa [#allocation3], 0
    %14 = vsyncpa [#allocation6], 0
    %15 = vsyncpa [#allocation9], 0
    %16 = vsyncpa [#allocation12], 0
    %17 = vsyncpa [#allocation4], 0
    %18 = vsyncpa [#allocation15], 0
    // Predicated region
    $region2: #{gin_forward.3} parent=1 // pred_check
      _
    $region3: #{gin_forward.3} parent=1 // pred_check_branch
      %20 = sbr.rel (0) target = $region5
    $region4: #{gin_forward.3} parent=1 // pred_region
      %s22 = ssub.s32 2048, 2048
      %23 = vsyncadd [#allocation3], %s22
      %s24 = sshll.u32 [#allocation2], 4
      %s25 = int_to_ptr.vmem [resolvable:$true] %s24
      %30 = dma.hbm_to_vmem [thread:$0]  %s0, 2048, %s25, [#allocation3], 128, 128, 8
    $region5: #{gin_forward.3} parent=1 // pred_fallthru
      _
    // Predicated region
    $region6: #{gin_forward.3} parent=1 // pred_check
      _
    $region7: #{gin_forward.3} parent=1 // pred_check_branch
      %32 = sbr.rel (0) target = $region9
    $region8: #{gin_forward.3} parent=1 // pred_region
      %s34 = ssub.s32 128, 128
      %35 = vsyncadd [#allocation6], %s34
      %s37 = sshll.u32 [#allocation5], 4
      %s38 = int_to_ptr.vmem [resolvable:$true] %s37
      %40 = dma.hbm_to_vmem [thread:$0]  %s1, 128, %s38, [#allocation6]
    $region9: #{gin_forward.3} parent=1 // pred_fallthru
      _
    // Predicated region
    $region10: #{gin_forward.3} parent=1 // pred_check
      _
    $region11: #{gin_forward.3} parent=1 // pred_check_branch
      %42 = sbr.rel (0) target = $region13
    $region12: #{gin_forward.3} parent=1 // pred_region
      %s44 = ssub.s32 2048, 2048
      %45 = vsyncadd [#allocation6], %s44
      %s46 = sshll.u32 [#allocation7], 4
      %s47 = int_to_ptr.vmem [resolvable:$true] %s46
      %52 = dma.hbm_to_vmem [thread:$0]  %s2, 2048, %s47, [#allocation6], 128, 128, 8
    $region13: #{gin_forward.3} parent=1 // pred_fallthru
      _
    // Predicated region
    $region14: #{gin_forward.3} parent=1 // pred_check
      _
    $region15: #{gin_forward.3} parent=1 // pred_check_branch
      %54 = sbr.rel (0) target = $region17
    $region16: #{gin_forward.3} parent=1 // pred_region
      %s56 = ssub.s32 16, 16
      %57 = vsyncadd [#allocation9], %s56
      %s59 = sshll.u32 [#allocation8], 4
      %s60 = int_to_ptr.vmem [resolvable:$true] %s59
      %62 = dma.hbm_to_vmem [thread:$0]  %s3, 16, %s60, [#allocation9]
    $region17: #{gin_forward.3} parent=1 // pred_fallthru
      _
    // Predicated region
    $region18: #{gin_forward.3} parent=1 // pred_check
      _
    $region19: #{gin_forward.3} parent=1 // pred_check_branch
      %64 = sbr.rel (0) target = $region21
    $region20: #{gin_forward.3} parent=1 // pred_region
      %s66 = ssub.s32 2048, 2048
      %67 = vsyncadd [#allocation9], %s66
      %s68 = sshll.u32 [#allocation10], 4
      %s69 = int_to_ptr.vmem [resolvable:$true] %s68
      %74 = dma.hbm_to_vmem [thread:$0]  %s4, 2048, %s69, [#allocation9], 128, 128, 8
    $region21: #{gin_forward.3} parent=1 // pred_fallthru
      _
    // Predicated region
    $region22: #{gin_forward.3} parent=1 // pred_check
      _
    $region23: #{gin_forward.3} parent=1 // pred_check_branch
      %76 = sbr.rel (0) target = $region25
    $region24: #{gin_forward.3} parent=1 // pred_region
      %s78 = ssub.s32 16, 16
      %79 = vsyncadd [#allocation12], %s78
      %s81 = sshll.u32 [#allocation11], 4
      %s82 = int_to_ptr.vmem [resolvable:$true] %s81
      %84 = dma.hbm_to_vmem [thread:$0]  %s5, 16, %s82, [#allocation12]
    $region25: #{gin_forward.3} parent=1 // pred_fallthru
      _
    // Predicated region
    $region26: #{gin_forward.3} parent=1 // pred_check
      _
    $region27: #{gin_forward.3} parent=1 // pred_check_branch
      %86 = sbr.rel (0) target = $region29
    $region28: #{gin_forward.3} parent=1 // pred_region
      %87 = dma.done [#allocation3], 2048
    $region29: #{gin_forward.3} parent=1 // pred_fallthru
      _
    // Predicated region
    $region30: #{gin_forward.3} parent=1 // pred_check
      _
    $region31: #{gin_forward.3} parent=1 // pred_check_branch
      %89 = sbr.rel (0) target = $region33
    $region32: #{gin_forward.3} parent=1 // pred_region
      %90 = dma.done [#allocation6], 128
    $region33: #{gin_forward.3} parent=1 // pred_fallthru
      _
    // Predicated region
    $region34: #{gin_forward.3} parent=1 // pred_check
      _
    $region35: #{gin_forward.3} parent=1 // pred_check_branch
      %92 = sbr.rel (0) target = $region37
    $region36: #{gin_forward.3} parent=1 // pred_region
      %93 = dma.done [#allocation6], 2048
    $region37: #{gin_forward.3} parent=1 // pred_fallthru
      _
    // Predicated region
    $region38: #{gin_forward.3} parent=1 // pred_check
      _
    $region39: #{gin_forward.3} parent=1 // pred_check_branch
      %95 = sbr.rel (0) target = $region41
    $region40: #{gin_forward.3} parent=1 // pred_region
      %96 = dma.done [#allocation9], 16
    $region41: #{gin_forward.3} parent=1 // pred_fallthru
      _
    // Predicated region
    $region42: #{gin_forward.3} parent=1 // pred_check
      _
    $region43: #{gin_forward.3} parent=1 // pred_check_branch
      %98 = sbr.rel (0) target = $region45
    $region44: #{gin_forward.3} parent=1 // pred_region
      %99 = dma.done [#allocation9], 2048
    $region45: #{gin_forward.3} parent=1 // pred_fallthru
      _
    // Predicated region
    $region46: #{gin_forward.3} parent=1 // pred_check
      _
    $region47: #{gin_forward.3} parent=1 // pred_check_branch
      %101 = sbr.rel (0) target = $region49
    $region48: #{gin_forward.3} parent=1 // pred_region
      %102 = dma.done [#allocation12], 16
    $region49: #{gin_forward.3} parent=1 // pred_fallthru
      _
    %v103 = vld [vmem:[#allocation2] sm:$0xff]
    %v104 = vld [vmem:[#allocation2 + $0x8] sm:$0xff]
    %v105 = vld [vmem:[#allocation2 + $0x10] sm:$0xff]
    %v106 = vld [vmem:[#allocation2 + $0x18] sm:$0xff]
    %v107 = vld [vmem:[#allocation2 + $0x20] sm:$0xff]
    %v108 = vld [vmem:[#allocation2 + $0x28] sm:$0xff]
    %v109 = vld [vmem:[#allocation2 + $0x30] sm:$0xff]
    %v110 = vld [vmem:[#allocation2 + $0x38] sm:$0xff]
    %v111 = vld [vmem:[#allocation2 + $0x40] sm:$0xff]
    %v112 = vld [vmem:[#allocation2 + $0x48] sm:$0xff]
    %v113 = vld [vmem:[#allocation2 + $0x50] sm:$0xff]
    %v114 = vld [vmem:[#allocation2 + $0x58] sm:$0xff]
    %v115 = vld [vmem:[#allocation2 + $0x60] sm:$0xff]
    %v116 = vld [vmem:[#allocation2 + $0x68] sm:$0xff]
    %v117 = vld [vmem:[#allocation2 + $0x70] sm:$0xff]
    %v118 = vld [vmem:[#allocation2 + $0x78] sm:$0xff]
    %v119 = vld [vmem:[#allocation7] sm:$0xff]
    %v120 = vld [vmem:[#allocation7 + $0x8] sm:$0xff]
    %v121 = vld [vmem:[#allocation7 + $0x10] sm:$0xff]
    %v122 = vld [vmem:[#allocation7 + $0x18] sm:$0xff]
    %v123 = vld [vmem:[#allocation7 + $0x20] sm:$0xff]
    %v124 = vld [vmem:[#allocation7 + $0x28] sm:$0xff]
    %v125 = vld [vmem:[#allocation7 + $0x30] sm:$0xff]
    %v126 = vld [vmem:[#allocation7 + $0x38] sm:$0xff]
    %v127 = vld [vmem:[#allocation7 + $0x40] sm:$0xff]
    %v128 = vld [vmem:[#allocation7 + $0x48] sm:$0xff]
    %v129 = vld [vmem:[#allocation7 + $0x50] sm:$0xff]
    %v130 = vld [vmem:[#allocation7 + $0x58] sm:$0xff]
    %v131 = vld [vmem:[#allocation7 + $0x60] sm:$0xff]
    %v132 = vld [vmem:[#allocation7 + $0x68] sm:$0xff]
    %v133 = vld [vmem:[#allocation7 + $0x70] sm:$0xff]
    %v134 = vld [vmem:[#allocation7 + $0x78] sm:$0xff]
    %v135 = vld [vmem:[#allocation8] sm:$0x1]
    %v137 = vlaneseq
    %v138 = vshrl.u32 %v137, 7
    %v139 = vsub.s32 0, %v138
    %v140 = vrot.slane %v135, %v139
    %142 = vmatprep.subr.mxu0 0.0
    %143 = vmatpush1.msra.mxu0 %v119
    %144 = vmatprep.subr.mxu0 0.0
    %145 = vmatpush1.msra.mxu0 %v120
    %146 = vmatprep.subr.mxu0 0.0
    %147 = vmatpush1.msra.mxu0 %v121
    %148 = vmatprep.subr.mxu0 0.0
    %149 = vmatpush1.msra.mxu0 %v122
    %150 = vmatprep.subr.mxu0 0.0
    %151 = vmatpush1.msra.mxu0 %v123
    %152 = vmatprep.subr.mxu0 0.0
    %153 = vmatpush1.msra.mxu0 %v124
    %154 = vmatprep.subr.mxu0 0.0
    %155 = vmatpush1.msra.mxu0 %v125
    %156 = vmatprep.subr.mxu0 0.0
    %157 = vmatpush1.msra.mxu0 %v126
    %158 = vmatprep.subr.mxu0 0.0
    %159 = vmatpush1.msra.mxu0 %v127
    %160 = vmatprep.subr.mxu0 0.0
    %161 = vmatpush1.msra.mxu0 %v128
    %162 = vmatprep.subr.mxu0 0.0
    %163 = vmatpush1.msra.mxu0 %v129
    %164 = vmatprep.subr.mxu0 0.0
    %165 = vmatpush1.msra.mxu0 %v130
    %166 = vmatprep.subr.mxu0 0.0
    %167 = vmatpush1.msra.mxu0 %v131
    %168 = vmatprep.subr.mxu0 0.0
    %169 = vmatpush1.msra.mxu0 %v132
    %170 = vmatprep.subr.mxu0 0.0
    %171 = vmatpush1.msra.mxu0 %v133
    %172 = vmatprep.subr.mxu0 0.0
    %173 = vmatpush1.msra.mxu0 %v134
    %174 = vmatprep.subr.mxu0 0.0
    %175 = vmatpush1.msra.mxu0 0.0
    %176 = vmatprep.subr.mxu0 0.0
    %177 = vmatpush1.msra.mxu0 0.0
    %178 = vmatprep.subr.mxu0 0.0
    %179 = vmatpush1.msra.mxu0 0.0
    %180 = vmatprep.subr.mxu0 0.0
    %181 = vmatpush1.msra.mxu0 0.0
    %182 = vmatprep.subr.mxu0 0.0
    %183 = vmatpush1.msra.mxu0 0.0
    %184 = vmatprep.subr.mxu0 0.0
    %185 = vmatpush1.msra.mxu0 0.0
    %186 = vmatprep.subr.mxu0 0.0
    %187 = vmatpush1.msra.mxu0 0.0
    %188 = vmatprep.subr.mxu0 0.0
    %189 = vmatpush1.msra.mxu0 0.0
    %190 = vmatprep.subr.mxu0 0.0
    %191 = vmatpush1.msra.mxu0 0.0
    %192 = vmatprep.subr.mxu0 0.0
    %193 = vmatpush1.msra.mxu0 0.0
    %194 = vmatprep.subr.mxu0 0.0
    %195 = vmatpush1.msra.mxu0 0.0
    %196 = vmatprep.subr.mxu0 0.0
    %197 = vmatpush1.msra.mxu0 0.0
    %198 = vmatprep.subr.mxu0 0.0
    %199 = vmatpush1.msra.mxu0 0.0
    %200 = vmatprep.subr.mxu0 0.0
    %201 = vmatpush1.msra.mxu0 0.0
    %202 = vmatprep.subr.mxu0 0.0
    %203 = vmatpush1.msra.mxu0 0.0
    %204 = vmatprep.subr.mxu0 0.0
    %205 = vmatpush1.msra.mxu0 0.0
    %206 = vmatprep.mubr.f32.mxu0 0.0
    %207 = vmatmul.mubr.f32.gmra.mrb[0].mxu0 %v103
    %v208 = vpop.f32.mrb[0].mxu0
    %v209 = vadd.f32 %v140, %v208
    %v210 = vpop.f32.mrb[0].mxu0
    %211 = vmatprep.mubr.f32.mxu0 0.0
    %212 = vmatmul.mubr.f32.gmra.mrb[0].mxu0 %v104
    %v213 = vpop.f32.mrb[0].mxu0
    %v214 = vadd.f32 %v140, %v213
    %v215 = vpop.f32.mrb[0].mxu0
    %216 = vmatprep.mubr.f32.mxu0 0.0
    %217 = vmatmul.mubr.f32.gmra.mrb[0].mxu0 %v105
    %v218 = vpop.f32.mrb[0].mxu0
    %v219 = vadd.f32 %v140, %v218
    %v220 = vpop.f32.mrb[0].mxu0
    %221 = vmatprep.mubr.f32.mxu0 0.0
    %222 = vmatmul.mubr.f32.gmra.mrb[0].mxu0 %v106
    %v223 = vpop.f32.mrb[0].mxu0
    %v224 = vadd.f32 %v140, %v223
    %v225 = vpop.f32.mrb[0].mxu0
    %226 = vmatprep.mubr.f32.mxu0 0.0
    %227 = vmatmul.mubr.f32.gmra.mrb[0].mxu0 %v107
    %v228 = vpop.f32.mrb[0].mxu0
    %v229 = vadd.f32 %v140, %v228
    %v230 = vpop.f32.mrb[0].mxu0
    %231 = vmatprep.mubr.f32.mxu0 0.0
    %232 = vmatmul.mubr.f32.gmra.mrb[0].mxu0 %v108
    %v233 = vpop.f32.mrb[0].mxu0
    %v234 = vadd.f32 %v140, %v233
    %v235 = vpop.f32.mrb[0].mxu0
    %236 = vmatprep.mubr.f32.mxu0 0.0
    %237 = vmatmul.mubr.f32.gmra.mrb[0].mxu0 %v109
    %v238 = vpop.f32.mrb[0].mxu0
    %v239 = vadd.f32 %v140, %v238
    %v240 = vpop.f32.mrb[0].mxu0
    %241 = vmatprep.mubr.f32.mxu0 0.0
    %242 = vmatmul.mubr.f32.gmra.mrb[0].mxu0 %v110
    %v243 = vpop.f32.mrb[0].mxu0
    %v244 = vadd.f32 %v140, %v243
    %v245 = vpop.f32.mrb[0].mxu0
    %246 = vmatprep.mubr.f32.mxu0 0.0
    %247 = vmatmul.mubr.f32.gmra.mrb[0].mxu0 %v111
    %v248 = vpop.f32.mrb[0].mxu0
    %v249 = vadd.f32 %v140, %v248
    %v250 = vpop.f32.mrb[0].mxu0
    %251 = vmatprep.mubr.f32.mxu0 0.0
    %252 = vmatmul.mubr.f32.gmra.mrb[0].mxu0 %v112
    %v253 = vpop.f32.mrb[0].mxu0
    %v254 = vadd.f32 %v140, %v253
    %v255 = vpop.f32.mrb[0].mxu0
    %256 = vmatprep.mubr.f32.mxu0 0.0
    %257 = vmatmul.mubr.f32.gmra.mrb[0].mxu0 %v113
    %v258 = vpop.f32.mrb[0].mxu0
    %v259 = vadd.f32 %v140, %v258
    %v260 = vpop.f32.mrb[0].mxu0
    %261 = vmatprep.mubr.f32.mxu0 0.0
    %262 = vmatmul.mubr.f32.gmra.mrb[0].mxu0 %v114
    %v263 = vpop.f32.mrb[0].mxu0
    %v264 = vadd.f32 %v140, %v263
    %v265 = vpop.f32.mrb[0].mxu0
    %266 = vmatprep.mubr.f32.mxu0 0.0
    %267 = vmatmul.mubr.f32.gmra.mrb[0].mxu0 %v115
    %v268 = vpop.f32.mrb[0].mxu0
    %v269 = vadd.f32 %v140, %v268
    %v270 = vpop.f32.mrb[0].mxu0
    %271 = vmatprep.mubr.f32.mxu0 0.0
    %272 = vmatmul.mubr.f32.gmra.mrb[0].mxu0 %v116
    %v273 = vpop.f32.mrb[0].mxu0
    %v274 = vadd.f32 %v140, %v273
    %v275 = vpop.f32.mrb[0].mxu0
    %276 = vmatprep.mubr.f32.mxu0 0.0
    %277 = vmatmul.mubr.f32.gmra.mrb[0].mxu0 %v117
    %v278 = vpop.f32.mrb[0].mxu0
    %v279 = vadd.f32 %v140, %v278
    %v280 = vpop.f32.mrb[0].mxu0
    %281 = vmatprep.mubr.f32.mxu0 0.0
    %282 = vmatmul.mubr.f32.gmra.mrb[0].mxu0 %v118
    %v283 = vpop.f32.mrb[0].mxu0
    %v284 = vadd.f32 %v140, %v283
    %v285 = vpop.f32.mrb[0].mxu0
    %286 = vdwg.mxu0
    %v287 = vmax.f32 %v209, 0.0
    %v288 = vmax.f32 %v214, 0.0
    %v289 = vmax.f32 %v219, 0.0
    %v290 = vmax.f32 %v224, 0.0
    %v291 = vmax.f32 %v229, 0.0
    %v292 = vmax.f32 %v234, 0.0
    %v293 = vmax.f32 %v239, 0.0
    %v294 = vmax.f32 %v244, 0.0
    %v295 = vmax.f32 %v249, 0.0
    %v296 = vmax.f32 %v254, 0.0
    %v297 = vmax.f32 %v259, 0.0
    %v298 = vmax.f32 %v264, 0.0
    %v299 = vmax.f32 %v269, 0.0
    %v300 = vmax.f32 %v274, 0.0
    %v301 = vmax.f32 %v279, 0.0
    %v302 = vmax.f32 %v284, 0.0
    %v303 = vld [vmem:[#allocation10] sm:$0xff]
    %v304 = vld [vmem:[#allocation10 + $0x8] sm:$0xff]
    %v305 = vld [vmem:[#allocation10 + $0x10] sm:$0xff]
    %v306 = vld [vmem:[#allocation10 + $0x18] sm:$0xff]
    %v307 = vld [vmem:[#allocation10 + $0x20] sm:$0xff]
    %v308 = vld [vmem:[#allocation10 + $0x28] sm:$0xff]
    %v309 = vld [vmem:[#allocation10 + $0x30] sm:$0xff]
    %v310 = vld [vmem:[#allocation10 + $0x38] sm:$0xff]
    %v311 = vld [vmem:[#allocation10 + $0x40] sm:$0xff]
    %v312 = vld [vmem:[#allocation10 + $0x48] sm:$0xff]
    %v313 = vld [vmem:[#allocation10 + $0x50] sm:$0xff]
    %v314 = vld [vmem:[#allocation10 + $0x58] sm:$0xff]
    %v315 = vld [vmem:[#allocation10 + $0x60] sm:$0xff]
    %v316 = vld [vmem:[#allocation10 + $0x68] sm:$0xff]
    %v317 = vld [vmem:[#allocation10 + $0x70] sm:$0xff]
    %v318 = vld [vmem:[#allocation10 + $0x78] sm:$0xff]
    %v319 = vld [vmem:[#allocation11] sm:$0x1]
    %v321 = vlaneseq
    %v322 = vshrl.u32 %v321, 7
    %v323 = vsub.s32 0, %v322
    %v324 = vrot.slane %v319, %v323
    %326 = vmatprep.subr.mxu0 0.0
    %327 = vmatpush1.msra.mxu0 %v303
    %328 = vmatprep.subr.mxu0 0.0
    %329 = vmatpush1.msra.mxu0 %v304
    %330 = vmatprep.subr.mxu0 0.0
    %331 = vmatpush1.msra.mxu0 %v305
    %332 = vmatprep.subr.mxu0 0.0
    %333 = vmatpush1.msra.mxu0 %v306
    %334 = vmatprep.subr.mxu0 0.0
    %335 = vmatpush1.msra.mxu0 %v307
    %336 = vmatprep.subr.mxu0 0.0
    %337 = vmatpush1.msra.mxu0 %v308
    %338 = vmatprep.subr.mxu0 0.0
    %339 = vmatpush1.msra.mxu0 %v309
    %340 = vmatprep.subr.mxu0 0.0
    %341 = vmatpush1.msra.mxu0 %v310
    %342 = vmatprep.subr.mxu0 0.0
    %343 = vmatpush1.msra.mxu0 %v311
    %344 = vmatprep.subr.mxu0 0.0
    %345 = vmatpush1.msra.mxu0 %v312
    %346 = vmatprep.subr.mxu0 0.0
    %347 = vmatpush1.msra.mxu0 %v313
    %348 = vmatprep.subr.mxu0 0.0
    %349 = vmatpush1.msra.mxu0 %v314
    %350 = vmatprep.subr.mxu0 0.0
    %351 = vmatpush1.msra.mxu0 %v315
    %352 = vmatprep.subr.mxu0 0.0
    %353 = vmatpush1.msra.mxu0 %v316
    %354 = vmatprep.subr.mxu0 0.0
    %355 = vmatpush1.msra.mxu0 %v317
    %356 = vmatprep.subr.mxu0 0.0
    %357 = vmatpush1.msra.mxu0 %v318
    %358 = vmatprep.subr.mxu0 0.0
    %359 = vmatpush1.msra.mxu0 0.0
    %360 = vmatprep.subr.mxu0 0.0
    %361 = vmatpush1.msra.mxu0 0.0
    %362 = vmatprep.subr.mxu0 0.0
    %363 = vmatpush1.msra.mxu0 0.0
    %364 = vmatprep.subr.mxu0 0.0
    %365 = vmatpush1.msra.mxu0 0.0
    %366 = vmatprep.subr.mxu0 0.0
    %367 = vmatpush1.msra.mxu0 0.0
    %368 = vmatprep.subr.mxu0 0.0
    %369 = vmatpush1.msra.mxu0 0.0
    %370 = vmatprep.subr.mxu0 0.0
    %371 = vmatpush1.msra.mxu0 0.0
    %372 = vmatprep.subr.mxu0 0.0
    %373 = vmatpush1.msra.mxu0 0.0
    %374 = vmatprep.subr.mxu0 0.0
    %375 = vmatpush1.msra.mxu0 0.0
    %376 = vmatprep.subr.mxu0 0.0
    %377 = vmatpush1.msra.mxu0 0.0
    %378 = vmatprep.subr.mxu0 0.0
    %379 = vmatpush1.msra.mxu0 0.0
    %380 = vmatprep.subr.mxu0 0.0
    %381 = vmatpush1.msra.mxu0 0.0
    %382 = vmatprep.subr.mxu0 0.0
    %383 = vmatpush1.msra.mxu0 0.0
    %384 = vmatprep.subr.mxu0 0.0
    %385 = vmatpush1.msra.mxu0 0.0
    %386 = vmatprep.subr.mxu0 0.0
    %387 = vmatpush1.msra.mxu0 0.0
    %388 = vmatprep.subr.mxu0 0.0
    %389 = vmatpush1.msra.mxu0 0.0
    %390 = vmatprep.mubr.f32.mxu0 0.0
    %391 = vmatmul.mubr.f32.gmra.mrb[0].mxu0 %v287
    %v392 = vpop.f32.mrb[0].mxu0
    %v393 = vadd.f32 %v324, %v392
    %v394 = vpop.f32.mrb[0].mxu0
    %395 = vmatprep.mubr.f32.mxu0 0.0
    %396 = vmatmul.mubr.f32.gmra.mrb[0].mxu0 %v288
    %v397 = vpop.f32.mrb[0].mxu0
    %v398 = vadd.f32 %v324, %v397
    %v399 = vpop.f32.mrb[0].mxu0
    %400 = vmatprep.mubr.f32.mxu0 0.0
    %401 = vmatmul.mubr.f32.gmra.mrb[0].mxu0 %v289
    %v402 = vpop.f32.mrb[0].mxu0
    %v403 = vadd.f32 %v324, %v402
    %v404 = vpop.f32.mrb[0].mxu0
    %405 = vmatprep.mubr.f32.mxu0 0.0
    %406 = vmatmul.mubr.f32.gmra.mrb[0].mxu0 %v290
    %v407 = vpop.f32.mrb[0].mxu0
    %v408 = vadd.f32 %v324, %v407
    %v409 = vpop.f32.mrb[0].mxu0
    %410 = vmatprep.mubr.f32.mxu0 0.0
    %411 = vmatmul.mubr.f32.gmra.mrb[0].mxu0 %v291
    %v412 = vpop.f32.mrb[0].mxu0
    %v413 = vadd.f32 %v324, %v412
    %v414 = vpop.f32.mrb[0].mxu0
    %415 = vmatprep.mubr.f32.mxu0 0.0
    %416 = vmatmul.mubr.f32.gmra.mrb[0].mxu0 %v292
    %v417 = vpop.f32.mrb[0].mxu0
    %v418 = vadd.f32 %v324, %v417
    %v419 = vpop.f32.mrb[0].mxu0
    %420 = vmatprep.mubr.f32.mxu0 0.0
    %421 = vmatmul.mubr.f32.gmra.mrb[0].mxu0 %v293
    %v422 = vpop.f32.mrb[0].mxu0
    %v423 = vadd.f32 %v324, %v422
    %v424 = vpop.f32.mrb[0].mxu0
    %425 = vmatprep.mubr.f32.mxu0 0.0
    %426 = vmatmul.mubr.f32.gmra.mrb[0].mxu0 %v294
    %v427 = vpop.f32.mrb[0].mxu0
    %v428 = vadd.f32 %v324, %v427
    %v429 = vpop.f32.mrb[0].mxu0
    %430 = vmatprep.mubr.f32.mxu0 0.0
    %431 = vmatmul.mubr.f32.gmra.mrb[0].mxu0 %v295
    %v432 = vpop.f32.mrb[0].mxu0
    %v433 = vadd.f32 %v324, %v432
    %v434 = vpop.f32.mrb[0].mxu0
    %435 = vmatprep.mubr.f32.mxu0 0.0
    %436 = vmatmul.mubr.f32.gmra.mrb[0].mxu0 %v296
    %v437 = vpop.f32.mrb[0].mxu0
    %v438 = vadd.f32 %v324, %v437
    %v439 = vpop.f32.mrb[0].mxu0
    %440 = vmatprep.mubr.f32.mxu0 0.0
    %441 = vmatmul.mubr.f32.gmra.mrb[0].mxu0 %v297
    %v442 = vpop.f32.mrb[0].mxu0
    %v443 = vadd.f32 %v324, %v442
    %v444 = vpop.f32.mrb[0].mxu0
    %445 = vmatprep.mubr.f32.mxu0 0.0
    %446 = vmatmul.mubr.f32.gmra.mrb[0].mxu0 %v298
    %v447 = vpop.f32.mrb[0].mxu0
    %v448 = vadd.f32 %v324, %v447
    %v449 = vpop.f32.mrb[0].mxu0
    %450 = vmatprep.mubr.f32.mxu0 0.0
    %451 = vmatmul.mubr.f32.gmra.mrb[0].mxu0 %v299
    %v452 = vpop.f32.mrb[0].mxu0
    %v453 = vadd.f32 %v324, %v452
    %v454 = vpop.f32.mrb[0].mxu0
    %455 = vmatprep.mubr.f32.mxu0 0.0
    %456 = vmatmul.mubr.f32.gmra.mrb[0].mxu0 %v300
    %v457 = vpop.f32.mrb[0].mxu0
    %v458 = vadd.f32 %v324, %v457
    %v459 = vpop.f32.mrb[0].mxu0
    %460 = vmatprep.mubr.f32.mxu0 0.0
    %461 = vmatmul.mubr.f32.gmra.mrb[0].mxu0 %v301
    %v462 = vpop.f32.mrb[0].mxu0
    %v463 = vadd.f32 %v324, %v462
    %v464 = vpop.f32.mrb[0].mxu0
    %465 = vmatprep.mubr.f32.mxu0 0.0
    %466 = vmatmul.mubr.f32.gmra.mrb[0].mxu0 %v302
    %v467 = vpop.f32.mrb[0].mxu0
    %v468 = vadd.f32 %v324, %v467
    %v469 = vpop.f32.mrb[0].mxu0
    %470 = vdwg.mxu0
    %v471 = vmax.f32 %v393, 0.0
    %v472 = vmax.f32 %v398, 0.0
    %v473 = vmax.f32 %v403, 0.0
    %v474 = vmax.f32 %v408, 0.0
    %v475 = vmax.f32 %v413, 0.0
    %v476 = vmax.f32 %v418, 0.0
    %v477 = vmax.f32 %v423, 0.0
    %v478 = vmax.f32 %v428, 0.0
    %v479 = vmax.f32 %v433, 0.0
    %v480 = vmax.f32 %v438, 0.0
    %v481 = vmax.f32 %v443, 0.0
    %v482 = vmax.f32 %v448, 0.0
    %v483 = vmax.f32 %v453, 0.0
    %v484 = vmax.f32 %v458, 0.0
    %v485 = vmax.f32 %v463, 0.0
    %v486 = vmax.f32 %v468, 0.0
    %s487 = smul.u32 0, 128
    %v488 = vlaneseq
    %v489 = vshrl.u32 %v488, 7
    %v490 = vadd.s32 %v489, 8
    %v491 = vadd.s32 %v489, 16
    %v492 = vadd.s32 %v489, 24
    %v493 = vadd.s32 %v489, 32
    %v494 = vadd.s32 %v489, 40
    %v495 = vadd.s32 %v489, 48
    %v496 = vadd.s32 %v489, 56
    %v497 = vadd.s32 %v489, 64
    %v498 = vadd.s32 %v489, 72
    %v499 = vadd.s32 %v489, 80
    %v500 = vadd.s32 %v489, 88
    %v501 = vadd.s32 %v489, 96
    %v502 = vadd.s32 %v489, 104
    %v503 = vadd.s32 %v489, 112
    %v504 = vadd.s32 %v489, 120
    %v505 = vstv %s487
    %v506 = vadd.s32 %v505, %v489
    %v507 = vadd.s32 %v505, %v490
    %v508 = vadd.s32 %v505, %v491
    %v509 = vadd.s32 %v505, %v492
    %v510 = vadd.s32 %v505, %v493
    %v511 = vadd.s32 %v505, %v494
    %v512 = vadd.s32 %v505, %v495
    %v513 = vadd.s32 %v505, %v496
    %v514 = vadd.s32 %v505, %v497
    %v515 = vadd.s32 %v505, %v498
    %v516 = vadd.s32 %v505, %v499
    %v517 = vadd.s32 %v505, %v500
    %v518 = vadd.s32 %v505, %v501
    %v519 = vadd.s32 %v505, %v502
    %v520 = vadd.s32 %v505, %v503
    %v521 = vadd.s32 %v505, %v504
    %vm522 = vcmp.lt.s32.totalorder %v506, 32
    %vm523 = vcmp.lt.s32.totalorder %v507, 32
    %vm524 = vcmp.lt.s32.totalorder %v508, 32
    %vm525 = vcmp.lt.s32.totalorder %v509, 32
    %vm526 = vcmp.lt.s32.totalorder %v510, 32
    %vm527 = vcmp.lt.s32.totalorder %v511, 32
    %vm528 = vcmp.lt.s32.totalorder %v512, 32
    %vm529 = vcmp.lt.s32.totalorder %v513, 32
    %vm530 = vcmp.lt.s32.totalorder %v514, 32
    %vm531 = vcmp.lt.s32.totalorder %v515, 32
    %vm532 = vcmp.lt.s32.totalorder %v516, 32
    %vm533 = vcmp.lt.s32.totalorder %v517, 32
    %vm534 = vcmp.lt.s32.totalorder %v518, 32
    %vm535 = vcmp.lt.s32.totalorder %v519, 32
    %vm536 = vcmp.lt.s32.totalorder %v520, 32
    %vm537 = vcmp.lt.s32.totalorder %v521, 32
    %v538 = vsel %vm522, 1, 0
    %v539 = vsel %vm523, 1, 0
    %v540 = vsel %vm524, 1, 0
    %v541 = vsel %vm525, 1, 0
    %v542 = vsel %vm526, 1, 0
    %v543 = vsel %vm527, 1, 0
    %v544 = vsel %vm528, 1, 0
    %v545 = vsel %vm529, 1, 0
    %v546 = vsel %vm530, 1, 0
    %v547 = vsel %vm531, 1, 0
    %v548 = vsel %vm532, 1, 0
    %v549 = vsel %vm533, 1, 0
    %v550 = vsel %vm534, 1, 0
    %v551 = vsel %vm535, 1, 0
    %v552 = vsel %vm536, 1, 0
    %v553 = vsel %vm537, 1, 0
    %vm554 = vcmp.eq.s32.totalorder %v538, 1
    %vm555 = vcmp.eq.s32.totalorder %v539, 1
    %vm556 = vcmp.eq.s32.totalorder %v540, 1
    %vm557 = vcmp.eq.s32.totalorder %v541, 1
    %vm558 = vcmp.eq.s32.totalorder %v542, 1
    %vm559 = vcmp.eq.s32.totalorder %v543, 1
    %vm560 = vcmp.eq.s32.totalorder %v544, 1
    %vm561 = vcmp.eq.s32.totalorder %v545, 1
    %vm562 = vcmp.eq.s32.totalorder %v546, 1
    %vm563 = vcmp.eq.s32.totalorder %v547, 1
    %vm564 = vcmp.eq.s32.totalorder %v548, 1
    %vm565 = vcmp.eq.s32.totalorder %v549, 1
    %vm566 = vcmp.eq.s32.totalorder %v550, 1
    %vm567 = vcmp.eq.s32.totalorder %v551, 1
    %vm568 = vcmp.eq.s32.totalorder %v552, 1
    %vm569 = vcmp.eq.s32.totalorder %v553, 1
    %v570 = vsel %vm554, %v471, 0.0
    %v571 = vsel %vm555, %v472, 0.0
    %v572 = vsel %vm556, %v473, 0.0
    %v573 = vsel %vm557, %v474, 0.0
    %v574 = vsel %vm558, %v475, 0.0
    %v575 = vsel %vm559, %v476, 0.0
    %v576 = vsel %vm560, %v477, 0.0
    %v577 = vsel %vm561, %v478, 0.0
    %v578 = vsel %vm562, %v479, 0.0
    %v579 = vsel %vm563, %v480, 0.0
    %v580 = vsel %vm564, %v481, 0.0
    %v581 = vsel %vm565, %v482, 0.0
    %v582 = vsel %vm566, %v483, 0.0
    %v583 = vsel %vm567, %v484, 0.0
    %v584 = vsel %vm568, %v485, 0.0
    %v585 = vsel %vm569, %v486, 0.0
    %v586 = vld [vmem:[#allocation5] sm:$0xff]
    %587 = vmatprep.subr.mxu0 0.0
    %588 = vmatpush1.msra.mxu0 %v570
    %589 = vmatprep.subr.mxu0 0.0
    %590 = vmatpush1.msra.mxu0 %v571
    %591 = vmatprep.subr.mxu0 0.0
    %592 = vmatpush1.msra.mxu0 %v572
    %593 = vmatprep.subr.mxu0 0.0
    %594 = vmatpush1.msra.mxu0 %v573
    %595 = vmatprep.subr.mxu0 0.0
    %596 = vmatpush1.msra.mxu0 %v574
    %597 = vmatprep.subr.mxu0 0.0
    %598 = vmatpush1.msra.mxu0 %v575
    %599 = vmatprep.subr.mxu0 0.0
    %600 = vmatpush1.msra.mxu0 %v576
    %601 = vmatprep.subr.mxu0 0.0
    %602 = vmatpush1.msra.mxu0 %v577
    %603 = vmatprep.subr.mxu0 0.0
    %604 = vmatpush1.msra.mxu0 %v578
    %605 = vmatprep.subr.mxu0 0.0
    %606 = vmatpush1.msra.mxu0 %v579
    %607 = vmatprep.subr.mxu0 0.0
    %608 = vmatpush1.msra.mxu0 %v580
    %609 = vmatprep.subr.mxu0 0.0
    %610 = vmatpush1.msra.mxu0 %v581
    %611 = vmatprep.subr.mxu0 0.0
    %612 = vmatpush1.msra.mxu0 %v582
    %613 = vmatprep.subr.mxu0 0.0
    %614 = vmatpush1.msra.mxu0 %v583
    %615 = vmatprep.subr.mxu0 0.0
    %616 = vmatpush1.msra.mxu0 %v584
    %617 = vmatprep.subr.mxu0 0.0
    %618 = vmatpush1.msra.mxu0 %v585
    %619 = vmatprep.subr.mxu0 0.0
    %620 = vmatpush1.msra.mxu0 0.0
    %621 = vmatprep.subr.mxu0 0.0
    %622 = vmatpush1.msra.mxu0 0.0
    %623 = vmatprep.subr.mxu0 0.0
    %624 = vmatpush1.msra.mxu0 0.0
    %625 = vmatprep.subr.mxu0 0.0
    %626 = vmatpush1.msra.mxu0 0.0
    %627 = vmatprep.subr.mxu0 0.0
    %628 = vmatpush1.msra.mxu0 0.0
    %629 = vmatprep.subr.mxu0 0.0
    %630 = vmatpush1.msra.mxu0 0.0
    %631 = vmatprep.subr.mxu0 0.0
    %632 = vmatpush1.msra.mxu0 0.0
    %633 = vmatprep.subr.mxu0 0.0
    %634 = vmatpush1.msra.mxu0 0.0
    %635 = vmatprep.subr.mxu0 0.0
    %636 = vmatpush1.msra.mxu0 0.0
    %637 = vmatprep.subr.mxu0 0.0
    %638 = vmatpush1.msra.mxu0 0.0
    %639 = vmatprep.subr.mxu0 0.0
    %640 = vmatpush1.msra.mxu0 0.0
    %641 = vmatprep.subr.mxu0 0.0
    %642 = vmatpush1.msra.mxu0 0.0
    %643 = vmatprep.subr.mxu0 0.0
    %644 = vmatpush1.msra.mxu0 0.0
    %645 = vmatprep.subr.mxu0 0.0
    %646 = vmatpush1.msra.mxu0 0.0
    %647 = vmatprep.subr.mxu0 0.0
    %648 = vmatpush1.msra.mxu0 0.0
    %649 = vmatprep.subr.mxu0 0.0
    %650 = vmatpush1.msra.mxu0 0.0
    %651 = vmatprep.mubr.f32.mxu0 0.0
    %652 = vmatmul.mubr.f32.gmra.mrb[0].mxu0 %v586
    %v653 = vpop.f32.mrb[0].mxu0
    %v654 = vadd.f32 0.0, %v653
    %v655 = vpop.f32.mrb[0].mxu0
    %656 = vdwg.mxu0
    %657 = vst [vmem:[#allocation14] sm:$0xff] %v654
    %v658 = vpack.c.bf16 %v571, %v570
    %v659 = vpack.c.bf16 %v573, %v572
    %v660 = vpack.c.bf16 %v575, %v574
    %v661 = vpack.c.bf16 %v577, %v576
    %v662 = vpack.c.bf16 %v579, %v578
    %v663 = vpack.c.bf16 %v581, %v580
    %v664 = vpack.c.bf16 %v583, %v582
    %v665 = vpack.c.bf16 %v585, %v584
    %v674 = vunpack.c.l.b16 %v658
    %v675 = vunpack.c.h.b16 %v658
    %v676 = vunpack.c.l.b16 %v659
    %v677 = vunpack.c.h.b16 %v659
    %v678 = vunpack.c.l.b16 %v660
    %v679 = vunpack.c.h.b16 %v660
    %v680 = vunpack.c.l.b16 %v661
    %v681 = vunpack.c.h.b16 %v661
    %v682 = vunpack.c.l.b16 %v662
    %v683 = vunpack.c.h.b16 %v662
    %v684 = vunpack.c.l.b16 %v663
    %v685 = vunpack.c.h.b16 %v663
    %v686 = vunpack.c.l.b16 %v664
    %v687 = vunpack.c.h.b16 %v664
    %v688 = vunpack.c.l.b16 %v665
    %v689 = vunpack.c.h.b16 %v665
    %v690 = vpack.c.b16 %v674, %v674
    %v691 = vpack.c.b16 %v675, %v675
    %v692 = vpack.c.b16 %v676, %v676
    %v693 = vpack.c.b16 %v677, %v677
    %v694 = vpack.c.b16 %v678, %v678
    %v695 = vpack.c.b16 %v679, %v679
    %v696 = vpack.c.b16 %v680, %v680
    %v697 = vpack.c.b16 %v681, %v681
    %v698 = vpack.c.b16 %v682, %v682
    %v699 = vpack.c.b16 %v683, %v683
    %v700 = vpack.c.b16 %v684, %v684
    %v701 = vpack.c.b16 %v685, %v685
    %v702 = vpack.c.b16 %v686, %v686
    %v703 = vpack.c.b16 %v687, %v687
    %v704 = vpack.c.b16 %v688, %v688
    %v705 = vpack.c.b16 %v689, %v689
    %722 = vst [vmem:[#allocation13] sm:$0xf] %v690
    %723 = vst [vmem:[#allocation13 + $0x4] sm:$0xf] %v691
    %724 = vst [vmem:[#allocation13 + $0x8] sm:$0xf] %v692
    %725 = vst [vmem:[#allocation13 + $0xc] sm:$0xf] %v693
    %726 = vst [vmem:[#allocation13 + $0x10] sm:$0xf] %v694
    %727 = vst [vmem:[#allocation13 + $0x14] sm:$0xf] %v695
    %728 = vst [vmem:[#allocation13 + $0x18] sm:$0xf] %v696
    %729 = vst [vmem:[#allocation13 + $0x1c] sm:$0xf] %v697
    %730 = vst [vmem:[#allocation13 + $0x20] sm:$0xf] %v698
    %731 = vst [vmem:[#allocation13 + $0x24] sm:$0xf] %v699
    %732 = vst [vmem:[#allocation13 + $0x28] sm:$0xf] %v700
    %733 = vst [vmem:[#allocation13 + $0x2c] sm:$0xf] %v701
    %734 = vst [vmem:[#allocation13 + $0x30] sm:$0xf] %v702
    %735 = vst [vmem:[#allocation13 + $0x34] sm:$0xf] %v703
    %736 = vst [vmem:[#allocation13 + $0x38] sm:$0xf] %v704
    %737 = vst [vmem:[#allocation13 + $0x3c] sm:$0xf] %v705
    // Predicated region
    $region50: #{gin_forward.3} parent=1 // pred_check
      _
    $region51: #{gin_forward.3} parent=1 // pred_check_branch
      %739 = sbr.rel (0) target = $region53
    $region52: #{gin_forward.3} parent=1 // pred_region
      %s741 = ssub.s32 1024, 1024
      %742 = vsyncadd [#allocation4], %s741
      %s743 = sshll.u32 [#allocation13], 4
      %s744 = int_to_ptr.vmem [resolvable:$true] %s743
      %749 = dma.vmem_to_hbm [thread:$0]  %s744, 1024, %s6, [#allocation4], 64, 64, 4
    $region53: #{gin_forward.3} parent=1 // pred_fallthru
      _
    // Predicated region
    $region54: #{gin_forward.3} parent=1 // pred_check
      _
    $region55: #{gin_forward.3} parent=1 // pred_check_branch
      %751 = sbr.rel (0) target = $region57
    $region56: #{gin_forward.3} parent=1 // pred_region
      %s753 = ssub.s32 128, 128
      %754 = vsyncadd [#allocation15], %s753
      %s756 = sshll.u32 [#allocation14], 4
      %s757 = int_to_ptr.vmem [resolvable:$true] %s756
      %759 = dma.vmem_to_hbm [thread:$0]  %s757, 128, %s7, [#allocation15]
    $region57: #{gin_forward.3} parent=1 // pred_fallthru
      _
    // Predicated region
    $region58: #{gin_forward.3} parent=1 // pred_check
      _
    $region59: #{gin_forward.3} parent=1 // pred_check_branch
      %761 = sbr.rel (0) target = $region61
    $region60: #{gin_forward.3} parent=1 // pred_region
      %762 = dma.done [#allocation4], 1024
    $region61: #{gin_forward.3} parent=1 // pred_fallthru
      _
    // Predicated region
    $region62: #{gin_forward.3} parent=1 // pred_check
      _
    $region63: #{gin_forward.3} parent=1 // pred_check_branch
      %764 = sbr.rel (0) target = $region65
    $region64: #{gin_forward.3} parent=1 // pred_region
      %765 = dma.done [#allocation15], 128
    $region65: #{gin_forward.3} parent=1 // pred_fallthru
      _
    %766 = vsyncpa [#allocation3], 1
    %767 = vsyncpa [#allocation6], 1
    %768 = vsyncpa [#allocation9], 1
    %769 = vsyncpa [#allocation12], 1
    %770 = vsyncpa [#allocation4], 1
    %771 = vsyncpa [#allocation15], 1

// kernel: gin_forward.4
$region0: #{gin_forward.4}
  #allocation0 [shape = 'u32[]', space=smem, size = 0x4, offset = 0x4, fixed_abs, tag = 'smem constant byte address 0x4 - core index']
  #allocation1 [shape = 'u32[144,128]{1,0:T(1,128)}', space=vmem, size = 0x12000, scoped, tag = 'internal scratch']
  #allocation2 [shape = 'f32[128,128]{1,0:T(8,128)}', space=vmem, size = 0x10000, scoped, tag = 'scratch operand']
  %s0 = inlined_call_operand.hbm [shape: bf16[128,128], index: 0, kind: input, shape index: {}]
  %s1 = inlined_call_operand.hbm [shape: bf16[128,128], index: 1, kind: input, shape index: {}]
  %s2 = inlined_call_operand.hbm [shape: f32[8,128], index: 2, kind: input, shape index: {}]
  %s3 = inlined_call_operand.hbm [shape: f32[128,128], index: 3, kind: input, shape index: {}]
  %s4 = inlined_call_operand.hbm [shape: f32[1,128], index: 4, kind: input, shape index: {}]
  %s5 = inlined_call_operand.hbm [shape: f32[128,128], index: 5, kind: input, shape index: {}]
  %s6 = inlined_call_operand.hbm [shape: f32[1,128], index: 6, kind: input, shape index: {}]
  %s7 = inlined_call_operand.hbm [shape: bf16[128,128], index: 7, kind: output, shape index: {0}]
  %s8 = inlined_call_operand.hbm [shape: f32[8,128], index: 8, kind: output, shape index: {1}]
  %9 = xla_tuple %s7, %s8
  %s10 = sld [smem:[#allocation0]]
  $region82: #{gin_forward.4} parent=0
    _
  %s12 = ssub.s32 1, %s10
  %s13 = scalar_select 0, %s12, %s10
  $region1: #{gin_forward.4} parent=0
    #allocation3 [shape = 'u8[32768]{0}', space=vmem, size = 0x8000, scoped, tag = 'input window, operand 0, single buffered']
    #allocation4 [shape = 's32[1]{0}', space=sflag, size = 0x4, scoped, tag = 'scoped memory for gin_forward.4']
    #allocation5 [shape = 's32[1]{0}', space=sflag, size = 0x4, scoped, tag = 'scoped memory for gin_forward.4']
    #allocation6 [shape = 'u8[32768]{0}', space=vmem, size = 0x8000, scoped, tag = 'input window, operand 1, single buffered']
    #allocation7 [shape = 's32[1]{0}', space=sflag, size = 0x4, scoped, tag = 'scoped memory for gin_forward.4']
    #allocation8 [shape = 'u8[4096]{0}', space=vmem, size = 0x1000, scoped, tag = 'input window, operand 2, single buffered']
    #allocation9 [shape = 'u8[65536]{0}', space=vmem, size = 0x10000, scoped, tag = 'input window, operand 3, single buffered']
    #allocation10 [shape = 's32[1]{0}', space=sflag, size = 0x4, scoped, tag = 'scoped memory for gin_forward.4']
    #allocation11 [shape = 'u8[512]{0}', space=vmem, size = 0x400, scoped, tag = 'input window, operand 4, single buffered']
    #allocation12 [shape = 'u8[65536]{0}', space=vmem, size = 0x10000, scoped, tag = 'input window, operand 5, single buffered']
    #allocation13 [shape = 's32[1]{0}', space=sflag, size = 0x4, scoped, tag = 'scoped memory for gin_forward.4']
    #allocation14 [shape = 'u8[512]{0}', space=vmem, size = 0x400, scoped, tag = 'input window, operand 6, single buffered']
    #allocation15 [shape = 'u8[32768]{0}', space=vmem, size = 0x8000, scoped, tag = 'output window, operand 0, single buffered']
    #allocation16 [shape = 'u8[4096]{0}', space=vmem, size = 0x1000, scoped, tag = 'output window, operand 1, single buffered']
    #allocation17 [shape = 's32[1]{0}', space=sflag, size = 0x4, scoped, tag = 'scoped memory for gin_forward.4']
    %14 = vsyncpa [#allocation4], 0
    %15 = vsyncpa [#allocation7], 0
    %16 = vsyncpa [#allocation10], 0
    %17 = vsyncpa [#allocation13], 0
    %18 = vsyncpa [#allocation5], 0
    %19 = vsyncpa [#allocation17], 0
    // Predicated region
    $region2: #{gin_forward.4} parent=1 // pred_check
      _
    $region3: #{gin_forward.4} parent=1 // pred_check_branch
      %21 = sbr.rel (0) target = $region5
    $region4: #{gin_forward.4} parent=1 // pred_region
      %s23 = ssub.s32 1024, 1024
      %24 = vsyncadd [#allocation4], %s23
      %s25 = sshll.u32 [#allocation3], 4
      %s26 = int_to_ptr.vmem [resolvable:$true] %s25
      %31 = dma.hbm_to_vmem [thread:$0]  %s0, 1024, %s26, [#allocation4], 64, 64, 4
    $region5: #{gin_forward.4} parent=1 // pred_fallthru
      _
    // Predicated region
    $region6: #{gin_forward.4} parent=1 // pred_check
      _
    $region7: #{gin_forward.4} parent=1 // pred_check_branch
      %33 = sbr.rel (0) target = $region9
    $region8: #{gin_forward.4} parent=1 // pred_region
      %s35 = ssub.s32 1024, 1024
      %36 = vsyncadd [#allocation7], %s35
      %s37 = sshll.u32 [#allocation6], 4
      %s38 = int_to_ptr.vmem [resolvable:$true] %s37
      %43 = dma.hbm_to_vmem [thread:$0]  %s1, 1024, %s38, [#allocation7], 64, 64, 4
    $region9: #{gin_forward.4} parent=1 // pred_fallthru
      _
    // Predicated region
    $region10: #{gin_forward.4} parent=1 // pred_check
      _
    $region11: #{gin_forward.4} parent=1 // pred_check_branch
      %45 = sbr.rel (0) target = $region13
    $region12: #{gin_forward.4} parent=1 // pred_region
      %s47 = ssub.s32 128, 128
      %48 = vsyncadd [#allocation7], %s47
      %s50 = sshll.u32 [#allocation8], 4
      %s51 = int_to_ptr.vmem [resolvable:$true] %s50
      %53 = dma.hbm_to_vmem [thread:$0]  %s2, 128, %s51, [#allocation7]
    $region13: #{gin_forward.4} parent=1 // pred_fallthru
      _
    // Predicated region
    $region14: #{gin_forward.4} parent=1 // pred_check
      _
    $region15: #{gin_forward.4} parent=1 // pred_check_branch
      %55 = sbr.rel (0) target = $region17
    $region16: #{gin_forward.4} parent=1 // pred_region
      %s57 = ssub.s32 2048, 2048
      %58 = vsyncadd [#allocation10], %s57
      %s59 = sshll.u32 [#allocation9], 4
      %s60 = int_to_ptr.vmem [resolvable:$true] %s59
      %65 = dma.hbm_to_vmem [thread:$0]  %s3, 2048, %s60, [#allocation10], 128, 128, 8
    $region17: #{gin_forward.4} parent=1 // pred_fallthru
      _
    // Predicated region
    $region18: #{gin_forward.4} parent=1 // pred_check
      _
    $region19: #{gin_forward.4} parent=1 // pred_check_branch
      %67 = sbr.rel (0) target = $region21
    $region20: #{gin_forward.4} parent=1 // pred_region
      %s69 = ssub.s32 16, 16
      %70 = vsyncadd [#allocation10], %s69
      %s72 = sshll.u32 [#allocation11], 4
      %s73 = int_to_ptr.vmem [resolvable:$true] %s72
      %75 = dma.hbm_to_vmem [thread:$0]  %s4, 16, %s73, [#allocation10]
    $region21: #{gin_forward.4} parent=1 // pred_fallthru
      _
    // Predicated region
    $region22: #{gin_forward.4} parent=1 // pred_check
      _
    $region23: #{gin_forward.4} parent=1 // pred_check_branch
      %77 = sbr.rel (0) target = $region25
    $region24: #{gin_forward.4} parent=1 // pred_region
      %s79 = ssub.s32 2048, 2048
      %80 = vsyncadd [#allocation13], %s79
      %s81 = sshll.u32 [#allocation12], 4
      %s82 = int_to_ptr.vmem [resolvable:$true] %s81
      %87 = dma.hbm_to_vmem [thread:$0]  %s5, 2048, %s82, [#allocation13], 128, 128, 8
    $region25: #{gin_forward.4} parent=1 // pred_fallthru
      _
    // Predicated region
    $region26: #{gin_forward.4} parent=1 // pred_check
      _
    $region27: #{gin_forward.4} parent=1 // pred_check_branch
      %89 = sbr.rel (0) target = $region29
    $region28: #{gin_forward.4} parent=1 // pred_region
      %s91 = ssub.s32 16, 16
      %92 = vsyncadd [#allocation13], %s91
      %s94 = sshll.u32 [#allocation14], 4
      %s95 = int_to_ptr.vmem [resolvable:$true] %s94
      %97 = dma.hbm_to_vmem [thread:$0]  %s6, 16, %s95, [#allocation13]
    $region29: #{gin_forward.4} parent=1 // pred_fallthru
      _
    // Predicated region
    $region30: #{gin_forward.4} parent=1 // pred_check
      _
    $region31: #{gin_forward.4} parent=1 // pred_check_branch
      %99 = sbr.rel (0) target = $region33
    $region32: #{gin_forward.4} parent=1 // pred_region
      %100 = dma.done [#allocation4], 1024
    $region33: #{gin_forward.4} parent=1 // pred_fallthru
      _
    // Predicated region
    $region34: #{gin_forward.4} parent=1 // pred_check
      _
    $region35: #{gin_forward.4} parent=1 // pred_check_branch
      %102 = sbr.rel (0) target = $region37
    $region36: #{gin_forward.4} parent=1 // pred_region
      %103 = dma.done [#allocation7], 1024
    $region37: #{gin_forward.4} parent=1 // pred_fallthru
      _
    // Predicated region
    $region38: #{gin_forward.4} parent=1 // pred_check
      _
    $region39: #{gin_forward.4} parent=1 // pred_check_branch
      %105 = sbr.rel (0) target = $region41
    $region40: #{gin_forward.4} parent=1 // pred_region
      %106 = dma.done [#allocation7], 128
    $region41: #{gin_forward.4} parent=1 // pred_fallthru
      _
    // Predicated region
    $region42: #{gin_forward.4} parent=1 // pred_check
      _
    $region43: #{gin_forward.4} parent=1 // pred_check_branch
      %108 = sbr.rel (0) target = $region45
    $region44: #{gin_forward.4} parent=1 // pred_region
      %109 = dma.done [#allocation10], 2048
    $region45: #{gin_forward.4} parent=1 // pred_fallthru
      _
    // Predicated region
    $region46: #{gin_forward.4} parent=1 // pred_check
      _
    $region47: #{gin_forward.4} parent=1 // pred_check_branch
      %111 = sbr.rel (0) target = $region49
    $region48: #{gin_forward.4} parent=1 // pred_region
      %112 = dma.done [#allocation10], 16
    $region49: #{gin_forward.4} parent=1 // pred_fallthru
      _
    // Predicated region
    $region50: #{gin_forward.4} parent=1 // pred_check
      _
    $region51: #{gin_forward.4} parent=1 // pred_check_branch
      %114 = sbr.rel (0) target = $region53
    $region52: #{gin_forward.4} parent=1 // pred_region
      %115 = dma.done [#allocation13], 2048
    $region53: #{gin_forward.4} parent=1 // pred_fallthru
      _
    // Predicated region
    $region54: #{gin_forward.4} parent=1 // pred_check
      _
    $region55: #{gin_forward.4} parent=1 // pred_check_branch
      %117 = sbr.rel (0) target = $region57
    $region56: #{gin_forward.4} parent=1 // pred_region
      %118 = dma.done [#allocation13], 16
    $region57: #{gin_forward.4} parent=1 // pred_fallthru
      _
    %p120 = scmp.eq.s32.totalorder 0, 0
    // Predicated region
    $region58: #{gin_forward.4} parent=1 // pred_check
      %p121 = pneg %p120
    $region59: #{gin_forward.4} parent=1 // pred_check_branch
      %123 = sbr.rel (%p121) target = $region61
    $region60: #{gin_forward.4} parent=1 // pred_region
      %124 = vst [vmem:[#allocation2] sm:$0xff] 0.0
      %125 = vst [vmem:[#allocation2 + $0x8] sm:$0xff] 0.0
      %126 = vst [vmem:[#allocation2 + $0x10] sm:$0xff] 0.0
      %127 = vst [vmem:[#allocation2 + $0x18] sm:$0xff] 0.0
      %128 = vst [vmem:[#allocation2 + $0x20] sm:$0xff] 0.0
      %129 = vst [vmem:[#allocation2 + $0x28] sm:$0xff] 0.0
      %130 = vst [vmem:[#allocation2 + $0x30] sm:$0xff] 0.0
      %131 = vst [vmem:[#allocation2 + $0x38] sm:$0xff] 0.0
      %132 = vst [vmem:[#allocation2 + $0x40] sm:$0xff] 0.0
      %133 = vst [vmem:[#allocation2 + $0x48] sm:$0xff] 0.0
      %134 = vst [vmem:[#allocation2 + $0x50] sm:$0xff] 0.0
      %135 = vst [vmem:[#allocation2 + $0x58] sm:$0xff] 0.0
      %136 = vst [vmem:[#allocation2 + $0x60] sm:$0xff] 0.0
      %137 = vst [vmem:[#allocation2 + $0x68] sm:$0xff] 0.0
      %138 = vst [vmem:[#allocation2 + $0x70] sm:$0xff] 0.0
      %139 = vst [vmem:[#allocation2 + $0x78] sm:$0xff] 0.0
    $region61: #{gin_forward.4} parent=1 // pred_fallthru
      _
    %s140 = smul.u32 0, 128
    %s141 = sshra.s32 %s140, 3
    %s142 = sand.u32 %s140, 7
    %s143 = smul.addr %s141, 4
    %s144 = scalar_lea.vmem [#allocation6], %s143
    %v145 = vld [vmem:[%s144] sm:$0xf]
    %v146 = vld [vmem:[%s144 + $0x4] sm:$0xf]
    %v147 = vld [vmem:[%s144 + $0x8] sm:$0xf]
    %v148 = vld [vmem:[%s144 + $0xc] sm:$0xf]
    %v149 = vld [vmem:[%s144 + $0x10] sm:$0xf]
    %v150 = vld [vmem:[%s144 + $0x14] sm:$0xf]
    %v151 = vld [vmem:[%s144 + $0x18] sm:$0xf]
    %v152 = vld [vmem:[%s144 + $0x1c] sm:$0xf]
    %v153 = vld [vmem:[%s144 + $0x20] sm:$0xf]
    %v154 = vld [vmem:[%s144 + $0x24] sm:$0xf]
    %v155 = vld [vmem:[%s144 + $0x28] sm:$0xf]
    %v156 = vld [vmem:[%s144 + $0x2c] sm:$0xf]
    %v157 = vld [vmem:[%s144 + $0x30] sm:$0xf]
    %v158 = vld [vmem:[%s144 + $0x34] sm:$0xf]
    %v159 = vld [vmem:[%s144 + $0x38] sm:$0xf]
    %v160 = vld [vmem:[%s144 + $0x3c] sm:$0xf]
    %v161 = vld [vmem:[#allocation2] sm:$0xff]
    %v162 = vld [vmem:[#allocation2 + $0x8] sm:$0xff]
    %v163 = vld [vmem:[#allocation2 + $0x10] sm:$0xff]
    %v164 = vld [vmem:[#allocation2 + $0x18] sm:$0xff]
    %v165 = vld [vmem:[#allocation2 + $0x20] sm:$0xff]
    %v166 = vld [vmem:[#allocation2 + $0x28] sm:$0xff]
    %v167 = vld [vmem:[#allocation2 + $0x30] sm:$0xff]
    %v168 = vld [vmem:[#allocation2 + $0x38] sm:$0xff]
    %v169 = vld [vmem:[#allocation2 + $0x40] sm:$0xff]
    %v170 = vld [vmem:[#allocation2 + $0x48] sm:$0xff]
    %v171 = vld [vmem:[#allocation2 + $0x50] sm:$0xff]
    %v172 = vld [vmem:[#allocation2 + $0x58] sm:$0xff]
    %v173 = vld [vmem:[#allocation2 + $0x60] sm:$0xff]
    %v174 = vld [vmem:[#allocation2 + $0x68] sm:$0xff]
    %v175 = vld [vmem:[#allocation2 + $0x70] sm:$0xff]
    %v176 = vld [vmem:[#allocation2 + $0x78] sm:$0xff]
    %v177 = vld [vmem:[#allocation3] sm:$0xf]
    %v178 = vld [vmem:[#allocation3 + $0x4] sm:$0xf]
    %v179 = vld [vmem:[#allocation3 + $0x8] sm:$0xf]
    %v180 = vld [vmem:[#allocation3 + $0xc] sm:$0xf]
    %v181 = vld [vmem:[#allocation3 + $0x10] sm:$0xf]
    %v182 = vld [vmem:[#allocation3 + $0x14] sm:$0xf]
    %v183 = vld [vmem:[#allocation3 + $0x18] sm:$0xf]
    %v184 = vld [vmem:[#allocation3 + $0x1c] sm:$0xf]
    %v185 = vld [vmem:[#allocation3 + $0x20] sm:$0xf]
    %v186 = vld [vmem:[#allocation3 + $0x24] sm:$0xf]
    %v187 = vld [vmem:[#allocation3 + $0x28] sm:$0xf]
    %v188 = vld [vmem:[#allocation3 + $0x2c] sm:$0xf]
    %v189 = vld [vmem:[#allocation3 + $0x30] sm:$0xf]
    %v190 = vld [vmem:[#allocation3 + $0x34] sm:$0xf]
    %v191 = vld [vmem:[#allocation3 + $0x38] sm:$0xf]
    %v192 = vld [vmem:[#allocation3 + $0x3c] sm:$0xf]
    %v209 = vunpack.c.l.b16 %v177
    %v210 = vunpack.c.l.b16 %v178
    %v211 = vunpack.c.l.b16 %v179
    %v212 = vunpack.c.l.b16 %v180
    %v213 = vunpack.c.l.b16 %v181
    %v214 = vunpack.c.l.b16 %v182
    %v215 = vunpack.c.l.b16 %v183
    %v216 = vunpack.c.l.b16 %v184
    %v217 = vunpack.c.l.b16 %v185
    %v218 = vunpack.c.l.b16 %v186
    %v219 = vunpack.c.l.b16 %v187
    %v220 = vunpack.c.l.b16 %v188
    %v221 = vunpack.c.l.b16 %v189
    %v222 = vunpack.c.l.b16 %v190
    %v223 = vunpack.c.l.b16 %v191
    %v224 = vunpack.c.l.b16 %v192
    %v225 = vpack.c.b16 %v210, %v209
    %v226 = vpack.c.b16 %v212, %v211
    %v227 = vpack.c.b16 %v214, %v213
    %v228 = vpack.c.b16 %v216, %v215
    %v229 = vpack.c.b16 %v218, %v217
    %v230 = vpack.c.b16 %v220, %v219
    %v231 = vpack.c.b16 %v222, %v221
    %v232 = vpack.c.b16 %v224, %v223
    %v257 = vunpack.c.l.b16 %v145
    %v258 = vunpack.c.l.b16 %v146
    %v259 = vunpack.c.l.b16 %v147
    %v260 = vunpack.c.l.b16 %v148
    %v261 = vunpack.c.l.b16 %v149
    %v262 = vunpack.c.l.b16 %v150
    %v263 = vunpack.c.l.b16 %v151
    %v264 = vunpack.c.l.b16 %v152
    %v265 = vunpack.c.l.b16 %v153
    %v266 = vunpack.c.l.b16 %v154
    %v267 = vunpack.c.l.b16 %v155
    %v268 = vunpack.c.l.b16 %v156
    %v269 = vunpack.c.l.b16 %v157
    %v270 = vunpack.c.l.b16 %v158
    %v271 = vunpack.c.l.b16 %v159
    %v272 = vunpack.c.l.b16 %v160
    %v273 = vpack.c.b16 %v258, %v257
    %v274 = vpack.c.b16 %v260, %v259
    %v275 = vpack.c.b16 %v262, %v261
    %v276 = vpack.c.b16 %v264, %v263
    %v277 = vpack.c.b16 %v266, %v265
    %v278 = vpack.c.b16 %v268, %v267
    %v279 = vpack.c.b16 %v270, %v269
    %v280 = vpack.c.b16 %v272, %v271
    %289 = vmatprep.subr.bf16.mxu0 0
    %290 = vmatpush1.bf16.msra.mxu0 %v273
    %291 = vmatprep.subr.bf16.mxu0 0
    %292 = vmatpush1.bf16.msra.mxu0 %v274
    %293 = vmatprep.subr.bf16.mxu0 0
    %294 = vmatpush1.bf16.msra.mxu0 %v275
    %295 = vmatprep.subr.bf16.mxu0 0
    %296 = vmatpush1.bf16.msra.mxu0 %v276
    %297 = vmatprep.subr.bf16.mxu0 0
    %298 = vmatpush1.bf16.msra.mxu0 %v277
    %299 = vmatprep.subr.bf16.mxu0 0
    %300 = vmatpush1.bf16.msra.mxu0 %v278
    %301 = vmatprep.subr.bf16.mxu0 0
    %302 = vmatpush1.bf16.msra.mxu0 %v279
    %303 = vmatprep.subr.bf16.mxu0 0
    %304 = vmatpush1.bf16.msra.mxu0 %v280
    %305 = vmatprep.subr.bf16.mxu0 0
    %306 = vmatpush1.bf16.msra.mxu0 0
    %307 = vmatprep.subr.bf16.mxu0 0
    %308 = vmatpush1.bf16.msra.mxu0 0
    %309 = vmatprep.subr.bf16.mxu0 0
    %310 = vmatpush1.bf16.msra.mxu0 0
    %311 = vmatprep.subr.bf16.mxu0 0
    %312 = vmatpush1.bf16.msra.mxu0 0
    %313 = vmatprep.subr.bf16.mxu0 0
    %314 = vmatpush1.bf16.msra.mxu0 0
    %315 = vmatprep.subr.bf16.mxu0 0
    %316 = vmatpush1.bf16.msra.mxu0 0
    %317 = vmatprep.subr.bf16.mxu0 0
    %318 = vmatpush1.bf16.msra.mxu0 0
    %319 = vmatprep.subr.bf16.mxu0 0
    %320 = vmatpush1.bf16.msra.mxu0 0
    %321 = vmatprep.mubr.bf16.mxu0 0
    %322 = vmatmul.mubr.bf16.gmra.mrb[0].mxu0 %v225
    %v323 = vpop.f32.mrb[0].mxu0
    %v324 = vadd.f32 0.0, %v323
    %v325 = vpop.f32.mrb[0].mxu0
    %v326 = vpop.f32.mrb[0].mxu0
    %v327 = vadd.f32 0.0, %v326
    %v328 = vpop.f32.mrb[0].mxu0
    %329 = vmatprep.mubr.bf16.mxu0 0
    %330 = vmatmul.mubr.bf16.gmra.mrb[0].mxu0 %v226
    %v331 = vpop.f32.mrb[0].mxu0
    %v332 = vadd.f32 0.0, %v331
    %v333 = vpop.f32.mrb[0].mxu0
    %v334 = vpop.f32.mrb[0].mxu0
    %v335 = vadd.f32 0.0, %v334
    %v336 = vpop.f32.mrb[0].mxu0
    %337 = vmatprep.mubr.bf16.mxu0 0
    %338 = vmatmul.mubr.bf16.gmra.mrb[0].mxu0 %v227
    %v339 = vpop.f32.mrb[0].mxu0
    %v340 = vadd.f32 0.0, %v339
    %v341 = vpop.f32.mrb[0].mxu0
    %v342 = vpop.f32.mrb[0].mxu0
    %v343 = vadd.f32 0.0, %v342
    %v344 = vpop.f32.mrb[0].mxu0
    %345 = vmatprep.mubr.bf16.mxu0 0
    %346 = vmatmul.mubr.bf16.gmra.mrb[0].mxu0 %v228
    %v347 = vpop.f32.mrb[0].mxu0
    %v348 = vadd.f32 0.0, %v347
    %v349 = vpop.f32.mrb[0].mxu0
    %v350 = vpop.f32.mrb[0].mxu0
    %v351 = vadd.f32 0.0, %v350
    %v352 = vpop.f32.mrb[0].mxu0
    %353 = vmatprep.mubr.bf16.mxu0 0
    %354 = vmatmul.mubr.bf16.gmra.mrb[0].mxu0 %v229
    %v355 = vpop.f32.mrb[0].mxu0
    %v356 = vadd.f32 0.0, %v355
    %v357 = vpop.f32.mrb[0].mxu0
    %v358 = vpop.f32.mrb[0].mxu0
    %v359 = vadd.f32 0.0, %v358
    %v360 = vpop.f32.mrb[0].mxu0
    %361 = vmatprep.mubr.bf16.mxu0 0
    %362 = vmatmul.mubr.bf16.gmra.mrb[0].mxu0 %v230
    %v363 = vpop.f32.mrb[0].mxu0
    %v364 = vadd.f32 0.0, %v363
    %v365 = vpop.f32.mrb[0].mxu0
    %v366 = vpop.f32.mrb[0].mxu0
    %v367 = vadd.f32 0.0, %v366
    %v368 = vpop.f32.mrb[0].mxu0
    %369 = vmatprep.mubr.bf16.mxu0 0
    %370 = vmatmul.mubr.bf16.gmra.mrb[0].mxu0 %v231
    %v371 = vpop.f32.mrb[0].mxu0
    %v372 = vadd.f32 0.0, %v371
    %v373 = vpop.f32.mrb[0].mxu0
    %v374 = vpop.f32.mrb[0].mxu0
    %v375 = vadd.f32 0.0, %v374
    %v376 = vpop.f32.mrb[0].mxu0
    %377 = vmatprep.mubr.bf16.mxu0 0
    %378 = vmatmul.mubr.bf16.gmra.mrb[0].mxu0 %v232
    %v379 = vpop.f32.mrb[0].mxu0
    %v380 = vadd.f32 0.0, %v379
    %v381 = vpop.f32.mrb[0].mxu0
    %v382 = vpop.f32.mrb[0].mxu0
    %v383 = vadd.f32 0.0, %v382
    %v384 = vpop.f32.mrb[0].mxu0
    %385 = vdwg.mxu0
    %v386 = vadd.f32 %v161, %v324
    %v387 = vadd.f32 %v162, %v327
    %v388 = vadd.f32 %v163, %v332
    %v389 = vadd.f32 %v164, %v335
    %v390 = vadd.f32 %v165, %v340
    %v391 = vadd.f32 %v166, %v343
    %v392 = vadd.f32 %v167, %v348
    %v393 = vadd.f32 %v168, %v351
    %v394 = vadd.f32 %v169, %v356
    %v395 = vadd.f32 %v170, %v359
    %v396 = vadd.f32 %v171, %v364
    %v397 = vadd.f32 %v172, %v367
    %v398 = vadd.f32 %v173, %v372
    %v399 = vadd.f32 %v174, %v375
    %v400 = vadd.f32 %v175, %v380
    %v401 = vadd.f32 %v176, %v383
    %402 = vst [vmem:[#allocation2] sm:$0xff] %v386
    %403 = vst [vmem:[#allocation2 + $0x8] sm:$0xff] %v387
    %404 = vst [vmem:[#allocation2 + $0x10] sm:$0xff] %v388
    %405 = vst [vmem:[#allocation2 + $0x18] sm:$0xff] %v389
    %406 = vst [vmem:[#allocation2 + $0x20] sm:$0xff] %v390
    %407 = vst [vmem:[#allocation2 + $0x28] sm:$0xff] %v391
    %408 = vst [vmem:[#allocation2 + $0x30] sm:$0xff] %v392
    %409 = vst [vmem:[#allocation2 + $0x38] sm:$0xff] %v393
    %410 = vst [vmem:[#allocation2 + $0x40] sm:$0xff] %v394
    %411 = vst [vmem:[#allocation2 + $0x48] sm:$0xff] %v395
    %412 = vst [vmem:[#allocation2 + $0x50] sm:$0xff] %v396
    %413 = vst [vmem:[#allocation2 + $0x58] sm:$0xff] %v397
    %414 = vst [vmem:[#allocation2 + $0x60] sm:$0xff] %v398
    %415 = vst [vmem:[#allocation2 + $0x68] sm:$0xff] %v399
    %416 = vst [vmem:[#allocation2 + $0x70] sm:$0xff] %v400
    %417 = vst [vmem:[#allocation2 + $0x78] sm:$0xff] %v401
    // Predicated region
    $region62: #{gin_forward.4} parent=1 // pred_check
      %p418 = pneg %p120
    $region63: #{gin_forward.4} parent=1 // pred_check_branch
      %420 = sbr.rel (%p418) target = $region65
    $region64: #{gin_forward.4} parent=1 // pred_region
      %v421 = vld [vmem:[#allocation2] sm:$0xff]
      %v422 = vld [vmem:[#allocation2 + $0x8] sm:$0xff]
      %v423 = vld [vmem:[#allocation2 + $0x10] sm:$0xff]
      %v424 = vld [vmem:[#allocation2 + $0x18] sm:$0xff]
      %v425 = vld [vmem:[#allocation2 + $0x20] sm:$0xff]
      %v426 = vld [vmem:[#allocation2 + $0x28] sm:$0xff]
      %v427 = vld [vmem:[#allocation2 + $0x30] sm:$0xff]
      %v428 = vld [vmem:[#allocation2 + $0x38] sm:$0xff]
      %v429 = vld [vmem:[#allocation2 + $0x40] sm:$0xff]
      %v430 = vld [vmem:[#allocation2 + $0x48] sm:$0xff]
      %v431 = vld [vmem:[#allocation2 + $0x50] sm:$0xff]
      %v432 = vld [vmem:[#allocation2 + $0x58] sm:$0xff]
      %v433 = vld [vmem:[#allocation2 + $0x60] sm:$0xff]
      %v434 = vld [vmem:[#allocation2 + $0x68] sm:$0xff]
      %v435 = vld [vmem:[#allocation2 + $0x70] sm:$0xff]
      %v436 = vld [vmem:[#allocation2 + $0x78] sm:$0xff]
      %v437 = vld [vmem:[#allocation9] sm:$0xff]
      %v438 = vld [vmem:[#allocation9 + $0x8] sm:$0xff]
      %v439 = vld [vmem:[#allocation9 + $0x10] sm:$0xff]
      %v440 = vld [vmem:[#allocation9 + $0x18] sm:$0xff]
      %v441 = vld [vmem:[#allocation9 + $0x20] sm:$0xff]
      %v442 = vld [vmem:[#allocation9 + $0x28] sm:$0xff]
      %v443 = vld [vmem:[#allocation9 + $0x30] sm:$0xff]
      %v444 = vld [vmem:[#allocation9 + $0x38] sm:$0xff]
      %v445 = vld [vmem:[#allocation9 + $0x40] sm:$0xff]
      %v446 = vld [vmem:[#allocation9 + $0x48] sm:$0xff]
      %v447 = vld [vmem:[#allocation9 + $0x50] sm:$0xff]
      %v448 = vld [vmem:[#allocation9 + $0x58] sm:$0xff]
      %v449 = vld [vmem:[#allocation9 + $0x60] sm:$0xff]
      %v450 = vld [vmem:[#allocation9 + $0x68] sm:$0xff]
      %v451 = vld [vmem:[#allocation9 + $0x70] sm:$0xff]
      %v452 = vld [vmem:[#allocation9 + $0x78] sm:$0xff]
      %v453 = vld [vmem:[#allocation11] sm:$0x1]
      %v455 = vlaneseq
      %v456 = vshrl.u32 %v455, 7
      %v457 = vsub.s32 0, %v456
      %v458 = vrot.slane %v453, %v457
      %460 = vmatprep.subr.mxu0 0.0
      %461 = vmatpush1.msra.mxu0 %v437
      %462 = vmatprep.subr.mxu0 0.0
      %463 = vmatpush1.msra.mxu0 %v438
      %464 = vmatprep.subr.mxu0 0.0
      %465 = vmatpush1.msra.mxu0 %v439
      %466 = vmatprep.subr.mxu0 0.0
      %467 = vmatpush1.msra.mxu0 %v440
      %468 = vmatprep.subr.mxu0 0.0
      %469 = vmatpush1.msra.mxu0 %v441
      %470 = vmatprep.subr.mxu0 0.0
      %471 = vmatpush1.msra.mxu0 %v442
      %472 = vmatprep.subr.mxu0 0.0
      %473 = vmatpush1.msra.mxu0 %v443
      %474 = vmatprep.subr.mxu0 0.0
      %475 = vmatpush1.msra.mxu0 %v444
      %476 = vmatprep.subr.mxu0 0.0
      %477 = vmatpush1.msra.mxu0 %v445
      %478 = vmatprep.subr.mxu0 0.0
      %479 = vmatpush1.msra.mxu0 %v446
      %480 = vmatprep.subr.mxu0 0.0
      %481 = vmatpush1.msra.mxu0 %v447
      %482 = vmatprep.subr.mxu0 0.0
      %483 = vmatpush1.msra.mxu0 %v448
      %484 = vmatprep.subr.mxu0 0.0
      %485 = vmatpush1.msra.mxu0 %v449
      %486 = vmatprep.subr.mxu0 0.0
      %487 = vmatpush1.msra.mxu0 %v450
      %488 = vmatprep.subr.mxu0 0.0
      %489 = vmatpush1.msra.mxu0 %v451
      %490 = vmatprep.subr.mxu0 0.0
      %491 = vmatpush1.msra.mxu0 %v452
      %492 = vmatprep.subr.mxu0 0.0
      %493 = vmatpush1.msra.mxu0 0.0
      %494 = vmatprep.subr.mxu0 0.0
      %495 = vmatpush1.msra.mxu0 0.0
      %496 = vmatprep.subr.mxu0 0.0
      %497 = vmatpush1.msra.mxu0 0.0
      %498 = vmatprep.subr.mxu0 0.0
      %499 = vmatpush1.msra.mxu0 0.0
      %500 = vmatprep.subr.mxu0 0.0
      %501 = vmatpush1.msra.mxu0 0.0
      %502 = vmatprep.subr.mxu0 0.0
      %503 = vmatpush1.msra.mxu0 0.0
      %504 = vmatprep.subr.mxu0 0.0
      %505 = vmatpush1.msra.mxu0 0.0
      %506 = vmatprep.subr.mxu0 0.0
      %507 = vmatpush1.msra.mxu0 0.0
      %508 = vmatprep.subr.mxu0 0.0
      %509 = vmatpush1.msra.mxu0 0.0
      %510 = vmatprep.subr.mxu0 0.0
      %511 = vmatpush1.msra.mxu0 0.0
      %512 = vmatprep.subr.mxu0 0.0
      %513 = vmatpush1.msra.mxu0 0.0
      %514 = vmatprep.subr.mxu0 0.0
      %515 = vmatpush1.msra.mxu0 0.0
      %516 = vmatprep.subr.mxu0 0.0
      %517 = vmatpush1.msra.mxu0 0.0
      %518 = vmatprep.subr.mxu0 0.0
      %519 = vmatpush1.msra.mxu0 0.0
      %520 = vmatprep.subr.mxu0 0.0
      %521 = vmatpush1.msra.mxu0 0.0
      %522 = vmatprep.subr.mxu0 0.0
      %523 = vmatpush1.msra.mxu0 0.0
      %524 = vmatprep.mubr.f32.mxu0 0.0
      %525 = vmatmul.mubr.f32.gmra.mrb[0].mxu0 %v421
      %v526 = vpop.f32.mrb[0].mxu0
      %v527 = vadd.f32 %v458, %v526
      %v528 = vpop.f32.mrb[0].mxu0
      %529 = vmatprep.mubr.f32.mxu0 0.0
      %530 = vmatmul.mubr.f32.gmra.mrb[0].mxu0 %v422
      %v531 = vpop.f32.mrb[0].mxu0
      %v532 = vadd.f32 %v458, %v531
      %v533 = vpop.f32.mrb[0].mxu0
      %534 = vmatprep.mubr.f32.mxu0 0.0
      %535 = vmatmul.mubr.f32.gmra.mrb[0].mxu0 %v423
      %v536 = vpop.f32.mrb[0].mxu0
      %v537 = vadd.f32 %v458, %v536
      %v538 = vpop.f32.mrb[0].mxu0
      %539 = vmatprep.mubr.f32.mxu0 0.0
      %540 = vmatmul.mubr.f32.gmra.mrb[0].mxu0 %v424
      %v541 = vpop.f32.mrb[0].mxu0
      %v542 = vadd.f32 %v458, %v541
      %v543 = vpop.f32.mrb[0].mxu0
      %544 = vmatprep.mubr.f32.mxu0 0.0
      %545 = vmatmul.mubr.f32.gmra.mrb[0].mxu0 %v425
      %v546 = vpop.f32.mrb[0].mxu0
      %v547 = vadd.f32 %v458, %v546
      %v548 = vpop.f32.mrb[0].mxu0
      %549 = vmatprep.mubr.f32.mxu0 0.0
      %550 = vmatmul.mubr.f32.gmra.mrb[0].mxu0 %v426
      %v551 = vpop.f32.mrb[0].mxu0
      %v552 = vadd.f32 %v458, %v551
      %v553 = vpop.f32.mrb[0].mxu0
      %554 = vmatprep.mubr.f32.mxu0 0.0
      %555 = vmatmul.mubr.f32.gmra.mrb[0].mxu0 %v427
      %v556 = vpop.f32.mrb[0].mxu0
      %v557 = vadd.f32 %v458, %v556
      %v558 = vpop.f32.mrb[0].mxu0
      %559 = vmatprep.mubr.f32.mxu0 0.0
      %560 = vmatmul.mubr.f32.gmra.mrb[0].mxu0 %v428
      %v561 = vpop.f32.mrb[0].mxu0
      %v562 = vadd.f32 %v458, %v561
      %v563 = vpop.f32.mrb[0].mxu0
      %564 = vmatprep.mubr.f32.mxu0 0.0
      %565 = vmatmul.mubr.f32.gmra.mrb[0].mxu0 %v429
      %v566 = vpop.f32.mrb[0].mxu0
      %v567 = vadd.f32 %v458, %v566
      %v568 = vpop.f32.mrb[0].mxu0
      %569 = vmatprep.mubr.f32.mxu0 0.0
      %570 = vmatmul.mubr.f32.gmra.mrb[0].mxu0 %v430
      %v571 = vpop.f32.mrb[0].mxu0
      %v572 = vadd.f32 %v458, %v571
      %v573 = vpop.f32.mrb[0].mxu0
      %574 = vmatprep.mubr.f32.mxu0 0.0
      %575 = vmatmul.mubr.f32.gmra.mrb[0].mxu0 %v431
      %v576 = vpop.f32.mrb[0].mxu0
      %v577 = vadd.f32 %v458, %v576
      %v578 = vpop.f32.mrb[0].mxu0
      %579 = vmatprep.mubr.f32.mxu0 0.0
      %580 = vmatmul.mubr.f32.gmra.mrb[0].mxu0 %v432
      %v581 = vpop.f32.mrb[0].mxu0
      %v582 = vadd.f32 %v458, %v581
      %v583 = vpop.f32.mrb[0].mxu0
      %584 = vmatprep.mubr.f32.mxu0 0.0
      %585 = vmatmul.mubr.f32.gmra.mrb[0].mxu0 %v433
      %v586 = vpop.f32.mrb[0].mxu0
      %v587 = vadd.f32 %v458, %v586
      %v588 = vpop.f32.mrb[0].mxu0
      %589 = vmatprep.mubr.f32.mxu0 0.0
      %590 = vmatmul.mubr.f32.gmra.mrb[0].mxu0 %v434
      %v591 = vpop.f32.mrb[0].mxu0
      %v592 = vadd.f32 %v458, %v591
      %v593 = vpop.f32.mrb[0].mxu0
      %594 = vmatprep.mubr.f32.mxu0 0.0
      %595 = vmatmul.mubr.f32.gmra.mrb[0].mxu0 %v435
      %v596 = vpop.f32.mrb[0].mxu0
      %v597 = vadd.f32 %v458, %v596
      %v598 = vpop.f32.mrb[0].mxu0
      %599 = vmatprep.mubr.f32.mxu0 0.0
      %600 = vmatmul.mubr.f32.gmra.mrb[0].mxu0 %v436
      %v601 = vpop.f32.mrb[0].mxu0
      %v602 = vadd.f32 %v458, %v601
      %v603 = vpop.f32.mrb[0].mxu0
      %604 = vdwg.mxu0
      %v605 = vmax.f32 %v527, 0.0
      %v606 = vmax.f32 %v532, 0.0
      %v607 = vmax.f32 %v537, 0.0
      %v608 = vmax.f32 %v542, 0.0
      %v609 = vmax.f32 %v547, 0.0
      %v610 = vmax.f32 %v552, 0.0
      %v611 = vmax.f32 %v557, 0.0
      %v612 = vmax.f32 %v562, 0.0
      %v613 = vmax.f32 %v567, 0.0
      %v614 = vmax.f32 %v572, 0.0
      %v615 = vmax.f32 %v577, 0.0
      %v616 = vmax.f32 %v582, 0.0
      %v617 = vmax.f32 %v587, 0.0
      %v618 = vmax.f32 %v592, 0.0
      %v619 = vmax.f32 %v597, 0.0
      %v620 = vmax.f32 %v602, 0.0
      %v621 = vld [vmem:[#allocation12] sm:$0xff]
      %v622 = vld [vmem:[#allocation12 + $0x8] sm:$0xff]
      %v623 = vld [vmem:[#allocation12 + $0x10] sm:$0xff]
      %v624 = vld [vmem:[#allocation12 + $0x18] sm:$0xff]
      %v625 = vld [vmem:[#allocation12 + $0x20] sm:$0xff]
      %v626 = vld [vmem:[#allocation12 + $0x28] sm:$0xff]
      %v627 = vld [vmem:[#allocation12 + $0x30] sm:$0xff]
      %v628 = vld [vmem:[#allocation12 + $0x38] sm:$0xff]
      %v629 = vld [vmem:[#allocation12 + $0x40] sm:$0xff]
      %v630 = vld [vmem:[#allocation12 + $0x48] sm:$0xff]
      %v631 = vld [vmem:[#allocation12 + $0x50] sm:$0xff]
      %v632 = vld [vmem:[#allocation12 + $0x58] sm:$0xff]
      %v633 = vld [vmem:[#allocation12 + $0x60] sm:$0xff]
      %v634 = vld [vmem:[#allocation12 + $0x68] sm:$0xff]
      %v635 = vld [vmem:[#allocation12 + $0x70] sm:$0xff]
      %v636 = vld [vmem:[#allocation12 + $0x78] sm:$0xff]
      %v637 = vld [vmem:[#allocation14] sm:$0x1]
      %v639 = vlaneseq
      %v640 = vshrl.u32 %v639, 7
      %v641 = vsub.s32 0, %v640
      %v642 = vrot.slane %v637, %v641
      %644 = vmatprep.subr.mxu0 0.0
      %645 = vmatpush1.msra.mxu0 %v621
      %646 = vmatprep.subr.mxu0 0.0
      %647 = vmatpush1.msra.mxu0 %v622
      %648 = vmatprep.subr.mxu0 0.0
      %649 = vmatpush1.msra.mxu0 %v623
      %650 = vmatprep.subr.mxu0 0.0
      %651 = vmatpush1.msra.mxu0 %v624
      %652 = vmatprep.subr.mxu0 0.0
      %653 = vmatpush1.msra.mxu0 %v625
      %654 = vmatprep.subr.mxu0 0.0
      %655 = vmatpush1.msra.mxu0 %v626
      %656 = vmatprep.subr.mxu0 0.0
      %657 = vmatpush1.msra.mxu0 %v627
      %658 = vmatprep.subr.mxu0 0.0
      %659 = vmatpush1.msra.mxu0 %v628
      %660 = vmatprep.subr.mxu0 0.0
      %661 = vmatpush1.msra.mxu0 %v629
      %662 = vmatprep.subr.mxu0 0.0
      %663 = vmatpush1.msra.mxu0 %v630
      %664 = vmatprep.subr.mxu0 0.0
      %665 = vmatpush1.msra.mxu0 %v631
      %666 = vmatprep.subr.mxu0 0.0
      %667 = vmatpush1.msra.mxu0 %v632
      %668 = vmatprep.subr.mxu0 0.0
      %669 = vmatpush1.msra.mxu0 %v633
      %670 = vmatprep.subr.mxu0 0.0
      %671 = vmatpush1.msra.mxu0 %v634
      %672 = vmatprep.subr.mxu0 0.0
      %673 = vmatpush1.msra.mxu0 %v635
      %674 = vmatprep.subr.mxu0 0.0
      %675 = vmatpush1.msra.mxu0 %v636
      %676 = vmatprep.subr.mxu0 0.0
      %677 = vmatpush1.msra.mxu0 0.0
      %678 = vmatprep.subr.mxu0 0.0
      %679 = vmatpush1.msra.mxu0 0.0
      %680 = vmatprep.subr.mxu0 0.0
      %681 = vmatpush1.msra.mxu0 0.0
      %682 = vmatprep.subr.mxu0 0.0
      %683 = vmatpush1.msra.mxu0 0.0
      %684 = vmatprep.subr.mxu0 0.0
      %685 = vmatpush1.msra.mxu0 0.0
      %686 = vmatprep.subr.mxu0 0.0
      %687 = vmatpush1.msra.mxu0 0.0
      %688 = vmatprep.subr.mxu0 0.0
      %689 = vmatpush1.msra.mxu0 0.0
      %690 = vmatprep.subr.mxu0 0.0
      %691 = vmatpush1.msra.mxu0 0.0
      %692 = vmatprep.subr.mxu0 0.0
      %693 = vmatpush1.msra.mxu0 0.0
      %694 = vmatprep.subr.mxu0 0.0
      %695 = vmatpush1.msra.mxu0 0.0
      %696 = vmatprep.subr.mxu0 0.0
      %697 = vmatpush1.msra.mxu0 0.0
      %698 = vmatprep.subr.mxu0 0.0
      %699 = vmatpush1.msra.mxu0 0.0
      %700 = vmatprep.subr.mxu0 0.0
      %701 = vmatpush1.msra.mxu0 0.0
      %702 = vmatprep.subr.mxu0 0.0
      %703 = vmatpush1.msra.mxu0 0.0
      %704 = vmatprep.subr.mxu0 0.0
      %705 = vmatpush1.msra.mxu0 0.0
      %706 = vmatprep.subr.mxu0 0.0
      %707 = vmatpush1.msra.mxu0 0.0
      %708 = vmatprep.mubr.f32.mxu0 0.0
      %709 = vmatmul.mubr.f32.gmra.mrb[0].mxu0 %v605
      %v710 = vpop.f32.mrb[0].mxu0
      %v711 = vadd.f32 %v642, %v710
      %v712 = vpop.f32.mrb[0].mxu0
      %713 = vmatprep.mubr.f32.mxu0 0.0
      %714 = vmatmul.mubr.f32.gmra.mrb[0].mxu0 %v606
      %v715 = vpop.f32.mrb[0].mxu0
      %v716 = vadd.f32 %v642, %v715
      %v717 = vpop.f32.mrb[0].mxu0
      %718 = vmatprep.mubr.f32.mxu0 0.0
      %719 = vmatmul.mubr.f32.gmra.mrb[0].mxu0 %v607
      %v720 = vpop.f32.mrb[0].mxu0
      %v721 = vadd.f32 %v642, %v720
      %v722 = vpop.f32.mrb[0].mxu0
      %723 = vmatprep.mubr.f32.mxu0 0.0
      %724 = vmatmul.mubr.f32.gmra.mrb[0].mxu0 %v608
      %v725 = vpop.f32.mrb[0].mxu0
      %v726 = vadd.f32 %v642, %v725
      %v727 = vpop.f32.mrb[0].mxu0
      %728 = vmatprep.mubr.f32.mxu0 0.0
      %729 = vmatmul.mubr.f32.gmra.mrb[0].mxu0 %v609
      %v730 = vpop.f32.mrb[0].mxu0
      %v731 = vadd.f32 %v642, %v730
      %v732 = vpop.f32.mrb[0].mxu0
      %733 = vmatprep.mubr.f32.mxu0 0.0
      %734 = vmatmul.mubr.f32.gmra.mrb[0].mxu0 %v610
      %v735 = vpop.f32.mrb[0].mxu0
      %v736 = vadd.f32 %v642, %v735
      %v737 = vpop.f32.mrb[0].mxu0
      %738 = vmatprep.mubr.f32.mxu0 0.0
      %739 = vmatmul.mubr.f32.gmra.mrb[0].mxu0 %v611
      %v740 = vpop.f32.mrb[0].mxu0
      %v741 = vadd.f32 %v642, %v740
      %v742 = vpop.f32.mrb[0].mxu0
      %743 = vmatprep.mubr.f32.mxu0 0.0
      %744 = vmatmul.mubr.f32.gmra.mrb[0].mxu0 %v612
      %v745 = vpop.f32.mrb[0].mxu0
      %v746 = vadd.f32 %v642, %v745
      %v747 = vpop.f32.mrb[0].mxu0
      %748 = vmatprep.mubr.f32.mxu0 0.0
      %749 = vmatmul.mubr.f32.gmra.mrb[0].mxu0 %v613
      %v750 = vpop.f32.mrb[0].mxu0
      %v751 = vadd.f32 %v642, %v750
      %v752 = vpop.f32.mrb[0].mxu0
      %753 = vmatprep.mubr.f32.mxu0 0.0
      %754 = vmatmul.mubr.f32.gmra.mrb[0].mxu0 %v614
      %v755 = vpop.f32.mrb[0].mxu0
      %v756 = vadd.f32 %v642, %v755
      %v757 = vpop.f32.mrb[0].mxu0
      %758 = vmatprep.mubr.f32.mxu0 0.0
      %759 = vmatmul.mubr.f32.gmra.mrb[0].mxu0 %v615
      %v760 = vpop.f32.mrb[0].mxu0
      %v761 = vadd.f32 %v642, %v760
      %v762 = vpop.f32.mrb[0].mxu0
      %763 = vmatprep.mubr.f32.mxu0 0.0
      %764 = vmatmul.mubr.f32.gmra.mrb[0].mxu0 %v616
      %v765 = vpop.f32.mrb[0].mxu0
      %v766 = vadd.f32 %v642, %v765
      %v767 = vpop.f32.mrb[0].mxu0
      %768 = vmatprep.mubr.f32.mxu0 0.0
      %769 = vmatmul.mubr.f32.gmra.mrb[0].mxu0 %v617
      %v770 = vpop.f32.mrb[0].mxu0
      %v771 = vadd.f32 %v642, %v770
      %v772 = vpop.f32.mrb[0].mxu0
      %773 = vmatprep.mubr.f32.mxu0 0.0
      %774 = vmatmul.mubr.f32.gmra.mrb[0].mxu0 %v618
      %v775 = vpop.f32.mrb[0].mxu0
      %v776 = vadd.f32 %v642, %v775
      %v777 = vpop.f32.mrb[0].mxu0
      %778 = vmatprep.mubr.f32.mxu0 0.0
      %779 = vmatmul.mubr.f32.gmra.mrb[0].mxu0 %v619
      %v780 = vpop.f32.mrb[0].mxu0
      %v781 = vadd.f32 %v642, %v780
      %v782 = vpop.f32.mrb[0].mxu0
      %783 = vmatprep.mubr.f32.mxu0 0.0
      %784 = vmatmul.mubr.f32.gmra.mrb[0].mxu0 %v620
      %v785 = vpop.f32.mrb[0].mxu0
      %v786 = vadd.f32 %v642, %v785
      %v787 = vpop.f32.mrb[0].mxu0
      %788 = vdwg.mxu0
      %v789 = vmax.f32 %v711, 0.0
      %v790 = vmax.f32 %v716, 0.0
      %v791 = vmax.f32 %v721, 0.0
      %v792 = vmax.f32 %v726, 0.0
      %v793 = vmax.f32 %v731, 0.0
      %v794 = vmax.f32 %v736, 0.0
      %v795 = vmax.f32 %v741, 0.0
      %v796 = vmax.f32 %v746, 0.0
      %v797 = vmax.f32 %v751, 0.0
      %v798 = vmax.f32 %v756, 0.0
      %v799 = vmax.f32 %v761, 0.0
      %v800 = vmax.f32 %v766, 0.0
      %v801 = vmax.f32 %v771, 0.0
      %v802 = vmax.f32 %v776, 0.0
      %v803 = vmax.f32 %v781, 0.0
      %v804 = vmax.f32 %v786, 0.0
      %s805 = smul.u32 0, 128
      %v806 = vlaneseq
      %v807 = vshrl.u32 %v806, 7
      %v808 = vadd.s32 %v807, 8
      %v809 = vadd.s32 %v807, 16
      %v810 = vadd.s32 %v807, 24
      %v811 = vadd.s32 %v807, 32
      %v812 = vadd.s32 %v807, 40
      %v813 = vadd.s32 %v807, 48
      %v814 = vadd.s32 %v807, 56
      %v815 = vadd.s32 %v807, 64
      %v816 = vadd.s32 %v807, 72
      %v817 = vadd.s32 %v807, 80
      %v818 = vadd.s32 %v807, 88
      %v819 = vadd.s32 %v807, 96
      %v820 = vadd.s32 %v807, 104
      %v821 = vadd.s32 %v807, 112
      %v822 = vadd.s32 %v807, 120
      %v823 = vstv %s805
      %v824 = vadd.s32 %v823, %v807
      %v825 = vadd.s32 %v823, %v808
      %v826 = vadd.s32 %v823, %v809
      %v827 = vadd.s32 %v823, %v810
      %v828 = vadd.s32 %v823, %v811
      %v829 = vadd.s32 %v823, %v812
      %v830 = vadd.s32 %v823, %v813
      %v831 = vadd.s32 %v823, %v814
      %v832 = vadd.s32 %v823, %v815
      %v833 = vadd.s32 %v823, %v816
      %v834 = vadd.s32 %v823, %v817
      %v835 = vadd.s32 %v823, %v818
      %v836 = vadd.s32 %v823, %v819
      %v837 = vadd.s32 %v823, %v820
      %v838 = vadd.s32 %v823, %v821
      %v839 = vadd.s32 %v823, %v822
      %vm840 = vcmp.lt.s32.totalorder %v824, 32
      %vm841 = vcmp.lt.s32.totalorder %v825, 32
      %vm842 = vcmp.lt.s32.totalorder %v826, 32
      %vm843 = vcmp.lt.s32.totalorder %v827, 32
      %vm844 = vcmp.lt.s32.totalorder %v828, 32
      %vm845 = vcmp.lt.s32.totalorder %v829, 32
      %vm846 = vcmp.lt.s32.totalorder %v830, 32
      %vm847 = vcmp.lt.s32.totalorder %v831, 32
      %vm848 = vcmp.lt.s32.totalorder %v832, 32
      %vm849 = vcmp.lt.s32.totalorder %v833, 32
      %vm850 = vcmp.lt.s32.totalorder %v834, 32
      %vm851 = vcmp.lt.s32.totalorder %v835, 32
      %vm852 = vcmp.lt.s32.totalorder %v836, 32
      %vm853 = vcmp.lt.s32.totalorder %v837, 32
      %vm854 = vcmp.lt.s32.totalorder %v838, 32
      %vm855 = vcmp.lt.s32.totalorder %v839, 32
      %v856 = vsel %vm840, 1, 0
      %v857 = vsel %vm841, 1, 0
      %v858 = vsel %vm842, 1, 0
      %v859 = vsel %vm843, 1, 0
      %v860 = vsel %vm844, 1, 0
      %v861 = vsel %vm845, 1, 0
      %v862 = vsel %vm846, 1, 0
      %v863 = vsel %vm847, 1, 0
      %v864 = vsel %vm848, 1, 0
      %v865 = vsel %vm849, 1, 0
      %v866 = vsel %vm850, 1, 0
      %v867 = vsel %vm851, 1, 0
      %v868 = vsel %vm852, 1, 0
      %v869 = vsel %vm853, 1, 0
      %v870 = vsel %vm854, 1, 0
      %v871 = vsel %vm855, 1, 0
      %vm872 = vcmp.eq.s32.totalorder %v856, 1
      %vm873 = vcmp.eq.s32.totalorder %v857, 1
      %vm874 = vcmp.eq.s32.totalorder %v858, 1
      %vm875 = vcmp.eq.s32.totalorder %v859, 1
      %vm876 = vcmp.eq.s32.totalorder %v860, 1
      %vm877 = vcmp.eq.s32.totalorder %v861, 1
      %vm878 = vcmp.eq.s32.totalorder %v862, 1
      %vm879 = vcmp.eq.s32.totalorder %v863, 1
      %vm880 = vcmp.eq.s32.totalorder %v864, 1
      %vm881 = vcmp.eq.s32.totalorder %v865, 1
      %vm882 = vcmp.eq.s32.totalorder %v866, 1
      %vm883 = vcmp.eq.s32.totalorder %v867, 1
      %vm884 = vcmp.eq.s32.totalorder %v868, 1
      %vm885 = vcmp.eq.s32.totalorder %v869, 1
      %vm886 = vcmp.eq.s32.totalorder %v870, 1
      %vm887 = vcmp.eq.s32.totalorder %v871, 1
      %v888 = vsel %vm872, %v789, 0.0
      %v889 = vsel %vm873, %v790, 0.0
      %v890 = vsel %vm874, %v791, 0.0
      %v891 = vsel %vm875, %v792, 0.0
      %v892 = vsel %vm876, %v793, 0.0
      %v893 = vsel %vm877, %v794, 0.0
      %v894 = vsel %vm878, %v795, 0.0
      %v895 = vsel %vm879, %v796, 0.0
      %v896 = vsel %vm880, %v797, 0.0
      %v897 = vsel %vm881, %v798, 0.0
      %v898 = vsel %vm882, %v799, 0.0
      %v899 = vsel %vm883, %v800, 0.0
      %v900 = vsel %vm884, %v801, 0.0
      %v901 = vsel %vm885, %v802, 0.0
      %v902 = vsel %vm886, %v803, 0.0
      %v903 = vsel %vm887, %v804, 0.0
      %v904 = vld [vmem:[#allocation8] sm:$0xff]
      %905 = vmatprep.subr.mxu0 0.0
      %906 = vmatpush1.msra.mxu0 %v888
      %907 = vmatprep.subr.mxu0 0.0
      %908 = vmatpush1.msra.mxu0 %v889
      %909 = vmatprep.subr.mxu0 0.0
      %910 = vmatpush1.msra.mxu0 %v890
      %911 = vmatprep.subr.mxu0 0.0
      %912 = vmatpush1.msra.mxu0 %v891
      %913 = vmatprep.subr.mxu0 0.0
      %914 = vmatpush1.msra.mxu0 %v892
      %915 = vmatprep.subr.mxu0 0.0
      %916 = vmatpush1.msra.mxu0 %v893
      %917 = vmatprep.subr.mxu0 0.0
      %918 = vmatpush1.msra.mxu0 %v894
      %919 = vmatprep.subr.mxu0 0.0
      %920 = vmatpush1.msra.mxu0 %v895
      %921 = vmatprep.subr.mxu0 0.0
      %922 = vmatpush1.msra.mxu0 %v896
      %923 = vmatprep.subr.mxu0 0.0
      %924 = vmatpush1.msra.mxu0 %v897
      %925 = vmatprep.subr.mxu0 0.0
      %926 = vmatpush1.msra.mxu0 %v898
      %927 = vmatprep.subr.mxu0 0.0
      %928 = vmatpush1.msra.mxu0 %v899
      %929 = vmatprep.subr.mxu0 0.0
      %930 = vmatpush1.msra.mxu0 %v900
      %931 = vmatprep.subr.mxu0 0.0
      %932 = vmatpush1.msra.mxu0 %v901
      %933 = vmatprep.subr.mxu0 0.0
      %934 = vmatpush1.msra.mxu0 %v902
      %935 = vmatprep.subr.mxu0 0.0
      %936 = vmatpush1.msra.mxu0 %v903
      %937 = vmatprep.subr.mxu0 0.0
      %938 = vmatpush1.msra.mxu0 0.0
      %939 = vmatprep.subr.mxu0 0.0
      %940 = vmatpush1.msra.mxu0 0.0
      %941 = vmatprep.subr.mxu0 0.0
      %942 = vmatpush1.msra.mxu0 0.0
      %943 = vmatprep.subr.mxu0 0.0
      %944 = vmatpush1.msra.mxu0 0.0
      %945 = vmatprep.subr.mxu0 0.0
      %946 = vmatpush1.msra.mxu0 0.0
      %947 = vmatprep.subr.mxu0 0.0
      %948 = vmatpush1.msra.mxu0 0.0
      %949 = vmatprep.subr.mxu0 0.0
      %950 = vmatpush1.msra.mxu0 0.0
      %951 = vmatprep.subr.mxu0 0.0
      %952 = vmatpush1.msra.mxu0 0.0
      %953 = vmatprep.subr.mxu0 0.0
      %954 = vmatpush1.msra.mxu0 0.0
      %955 = vmatprep.subr.mxu0 0.0
      %956 = vmatpush1.msra.mxu0 0.0
      %957 = vmatprep.subr.mxu0 0.0
      %958 = vmatpush1.msra.mxu0 0.0
      %959 = vmatprep.subr.mxu0 0.0
      %960 = vmatpush1.msra.mxu0 0.0
      %961 = vmatprep.subr.mxu0 0.0
      %962 = vmatpush1.msra.mxu0 0.0
      %963 = vmatprep.subr.mxu0 0.0
      %964 = vmatpush1.msra.mxu0 0.0
      %965 = vmatprep.subr.mxu0 0.0
      %966 = vmatpush1.msra.mxu0 0.0
      %967 = vmatprep.subr.mxu0 0.0
      %968 = vmatpush1.msra.mxu0 0.0
      %969 = vmatprep.mubr.f32.mxu0 0.0
      %970 = vmatmul.mubr.f32.gmra.mrb[0].mxu0 %v904
      %v971 = vpop.f32.mrb[0].mxu0
      %v972 = vadd.f32 0.0, %v971
      %v973 = vpop.f32.mrb[0].mxu0
      %974 = vdwg.mxu0
      %975 = vst [vmem:[#allocation16] sm:$0xff] %v972
      %v976 = vpack.c.bf16 %v889, %v888
      %v977 = vpack.c.bf16 %v891, %v890
      %v978 = vpack.c.bf16 %v893, %v892
      %v979 = vpack.c.bf16 %v895, %v894
      %v980 = vpack.c.bf16 %v897, %v896
      %v981 = vpack.c.bf16 %v899, %v898
      %v982 = vpack.c.bf16 %v901, %v900
      %v983 = vpack.c.bf16 %v903, %v902
      %v992 = vunpack.c.l.b16 %v976
      %v993 = vunpack.c.h.b16 %v976
      %v994 = vunpack.c.l.b16 %v977
      %v995 = vunpack.c.h.b16 %v977
      %v996 = vunpack.c.l.b16 %v978
      %v997 = vunpack.c.h.b16 %v978
      %v998 = vunpack.c.l.b16 %v979
      %v999 = vunpack.c.h.b16 %v979
      %v1000 = vunpack.c.l.b16 %v980
      %v1001 = vunpack.c.h.b16 %v980
      %v1002 = vunpack.c.l.b16 %v981
      %v1003 = vunpack.c.h.b16 %v981
      %v1004 = vunpack.c.l.b16 %v982
      %v1005 = vunpack.c.h.b16 %v982
      %v1006 = vunpack.c.l.b16 %v983
      %v1007 = vunpack.c.h.b16 %v983
      %v1008 = vpack.c.b16 %v992, %v992
      %v1009 = vpack.c.b16 %v993, %v993
      %v1010 = vpack.c.b16 %v994, %v994
      %v1011 = vpack.c.b16 %v995, %v995
      %v1012 = vpack.c.b16 %v996, %v996
      %v1013 = vpack.c.b16 %v997, %v997
      %v1014 = vpack.c.b16 %v998, %v998
      %v1015 = vpack.c.b16 %v999, %v999
      %v1016 = vpack.c.b16 %v1000, %v1000
      %v1017 = vpack.c.b16 %v1001, %v1001
      %v1018 = vpack.c.b16 %v1002, %v1002
      %v1019 = vpack.c.b16 %v1003, %v1003
      %v1020 = vpack.c.b16 %v1004, %v1004
      %v1021 = vpack.c.b16 %v1005, %v1005
      %v1022 = vpack.c.b16 %v1006, %v1006
      %v1023 = vpack.c.b16 %v1007, %v1007
      %1040 = vst [vmem:[#allocation15] sm:$0xf] %v1008
      %1041 = vst [vmem:[#allocation15 + $0x4] sm:$0xf] %v1009
      %1042 = vst [vmem:[#allocation15 + $0x8] sm:$0xf] %v1010
      %1043 = vst [vmem:[#allocation15 + $0xc] sm:$0xf] %v1011
      %1044 = vst [vmem:[#allocation15 + $0x10] sm:$0xf] %v1012
      %1045 = vst [vmem:[#allocation15 + $0x14] sm:$0xf] %v1013
      %1046 = vst [vmem:[#allocation15 + $0x18] sm:$0xf] %v1014
      %1047 = vst [vmem:[#allocation15 + $0x1c] sm:$0xf] %v1015
      %1048 = vst [vmem:[#allocation15 + $0x20] sm:$0xf] %v1016
      %1049 = vst [vmem:[#allocation15 + $0x24] sm:$0xf] %v1017
      %1050 = vst [vmem:[#allocation15 + $0x28] sm:$0xf] %v1018
      %1051 = vst [vmem:[#allocation15 + $0x2c] sm:$0xf] %v1019
      %1052 = vst [vmem:[#allocation15 + $0x30] sm:$0xf] %v1020
      %1053 = vst [vmem:[#allocation15 + $0x34] sm:$0xf] %v1021
      %1054 = vst [vmem:[#allocation15 + $0x38] sm:$0xf] %v1022
      %1055 = vst [vmem:[#allocation15 + $0x3c] sm:$0xf] %v1023
    $region65: #{gin_forward.4} parent=1 // pred_fallthru
      _
    // Predicated region
    $region66: #{gin_forward.4} parent=1 // pred_check
      _
    $region67: #{gin_forward.4} parent=1 // pred_check_branch
      %1057 = sbr.rel (0) target = $region69
    $region68: #{gin_forward.4} parent=1 // pred_region
      %s1059 = ssub.s32 1024, 1024
      %1060 = vsyncadd [#allocation5], %s1059
      %s1061 = sshll.u32 [#allocation15], 4
      %s1062 = int_to_ptr.vmem [resolvable:$true] %s1061
      %1067 = dma.vmem_to_hbm [thread:$0]  %s1062, 1024, %s7, [#allocation5], 64, 64, 4
    $region69: #{gin_forward.4} parent=1 // pred_fallthru
      _
    // Predicated region
    $region70: #{gin_forward.4} parent=1 // pred_check
      _
    $region71: #{gin_forward.4} parent=1 // pred_check_branch
      %1069 = sbr.rel (0) target = $region73
    $region72: #{gin_forward.4} parent=1 // pred_region
      %s1071 = ssub.s32 128, 128
      %1072 = vsyncadd [#allocation17], %s1071
      %s1074 = sshll.u32 [#allocation16], 4
      %s1075 = int_to_ptr.vmem [resolvable:$true] %s1074
      %1077 = dma.vmem_to_hbm [thread:$0]  %s1075, 128, %s8, [#allocation17]
    $region73: #{gin_forward.4} parent=1 // pred_fallthru
      _
    // Predicated region
    $region74: #{gin_forward.4} parent=1 // pred_check
      _
    $region75: #{gin_forward.4} parent=1 // pred_check_branch
      %1079 = sbr.rel (0) target = $region77
    $region76: #{gin_forward.4} parent=1 // pred_region
      %1080 = dma.done [#allocation5], 1024
    $region77: #{gin_forward.4} parent=1 // pred_fallthru
      _
    // Predicated region
    $region78: #{gin_forward.4} parent=1 // pred_check
      _
    $region79: #{gin_forward.4} parent=1 // pred_check_branch
      %1082 = sbr.rel (0) target = $region81
    $region80: #{gin_forward.4} parent=1 // pred_region
      %1083 = dma.done [#allocation17], 128
    $region81: #{gin_forward.4} parent=1 // pred_fallthru
      _
    %1084 = vsyncpa [#allocation4], 1
    %1085 = vsyncpa [#allocation7], 1
    %1086 = vsyncpa [#allocation10], 1
    %1087 = vsyncpa [#allocation13], 1
    %1088 = vsyncpa [#allocation5], 1
    %1089 = vsyncpa [#allocation17], 1

</llo_original>
